<compile_context>
chip_gen: v7x
topology: tpu7x:2x2x1
jax: 0.10.0
libtpu: 0.0.40
codegen_flags: <defaults>
</compile_context>

<pallas_src>
import numpy as np
import jax
import jax.numpy as jnp
from jax import lax
from jax.experimental import pallas as pl
from jax.experimental.pallas import tpu as pltpu


def _round_up(x, m):
    return (x + m - 1) // m * m


# ----------------------------- kernel body ---------------------------------

def _make_kernel(n_blocks):
    def kernel(x_ref, *rest):
        o_ref = rest[-1]
        wflat_ref = rest[-2]
        x = x_ref[...]                                   # (TB, L*E) float32
        idx = 0
        for _ in range(n_blocks):
            w1_ref, b1_ref, w2_ref, b2_ref = rest[idx:idx + 4]
            idx += 4
            identity = x
            h = jnp.dot(x, w1_ref[...], preferred_element_type=jnp.float32)
            h = jnp.maximum(h + b1_ref[...], 0.0)        # conv1 + folded BN + relu
            h = jnp.dot(h, w2_ref[...], preferred_element_type=jnp.float32)
            h = h + b2_ref[...]                          # conv2 + folded BN
            x = jnp.maximum(h + identity, 0.0)           # residual + relu
        # dropout: identity at inference
        # Flatten + Linear(E*L -> 1): elementwise mul with the re-laid-out
        # weight row, then a lane reduction -> one scalar per sample.
        prod = x * wflat_ref[...]
        o_ref[...] = jnp.sum(prod, axis=1, keepdims=True)
    return kernel


# ------------------------------- wrapper ------------------------------------

def chronologer_forward(tokens, kparams, *, batch_tile=256):
    embed = kparams["embed"]                    # (n_states, E)
    B, L = tokens.shape
    E = embed.shape[1]
    LE = L * E
    n_blocks = len(kparams["blocks"])

    # glue: embedding lookup (gather) + flatten to (B, L*E), lane index l*E+e
    x = jnp.take(embed, tokens, axis=0).astype(jnp.float32).reshape(B, LE)

    TB = min(batch_tile, _round_up(B, 8))       # samples per grid step
    B_pad = _round_up(B, TB)
    if B_pad != B:
        x = jnp.pad(x, ((0, B_pad - B), (0, 0)))

    inputs = [x]
    in_specs = [pl.BlockSpec((TB, LE), lambda b: (b, 0))]

    def _const_spec(shape):
        n = len(shape)
        return pl.BlockSpec(shape, lambda b, _n=n: (0,) * _n)

    for blk in kparams["blocks"]:
        for name in ("w1", "b1", "w2", "b2"):
            arr = blk[name]
            inputs.append(arr)
            in_specs.append(_const_spec(arr.shape))

    inputs.append(kparams["w_flat"])            # (1, L*E)
    in_specs.append(_const_spec(kparams["w_flat"].shape))

    out = pl.pallas_call(
        _make_kernel(n_blocks),
        out_shape=jax.ShapeDtypeStruct((B_pad, 1), jnp.float32),
        grid_spec=pltpu.PrefetchScalarGridSpec(
            num_scalar_prefetch=0,
            grid=(B_pad // TB,),
            in_specs=in_specs,
            out_specs=pl.BlockSpec((TB, 1), lambda b: (b, 0)),
        ),
        compiler_params=pltpu.CompilerParams(
            dimension_semantics=("parallel",)),
    )(*inputs)
    return out[:B] + kparams["b_out"].reshape(1, 1)


# --------------------- host-side weight pre-lowering ------------------------

def _bn_scale_shift(gamma, beta, mean, var, eps=1e-5):
    s = gamma / jnp.sqrt(var + eps)
    return s, beta - mean * s


def _conv_band_matrix(w_pt, L, dilation):
    """Dense (L*Cin, L*Cout) matrix for a dilated 'same' Conv1d.

    Row index = l_in*Cin + i, col index = l_out*Cout + o.  Zero padding
    outside [0, L) is implied by the missing band blocks.
    """
    w = np.asarray(w_pt, np.float32)            # (Cout, Cin, K)
    Cout, Cin, K = w.shape
    # PyTorch 'same' pads asymmetrically for even K; this model uses odd K.
    assert K % 2 == 1, "only odd kernel sizes supported"
    Wb = np.zeros((L * Cin, L * Cout), np.float32)
    for t in range(K):
        off = (t - K // 2) * dilation
        for l in range(L):
            lp = l + off
            if 0 <= lp < L:
                Wb[lp * Cin:(lp + 1) * Cin, l * Cout:(l + 1) * Cout] += w[:, :, t].T
    return jnp.asarray(Wb)


def build_kernel_params(params, *, vec_length, n_blocks):
    L = vec_length
    E = params["embed"].shape[1]
    blocks = []
    for blk in range(n_blocks):
        p = params["blocks"][blk]
        d = blk + 1                              # dilation d + 1 as in the module
        s1, sh1 = _bn_scale_shift(p["g1"], p["be1"], p["m1"], p["v1"])
        s2, sh2 = _bn_scale_shift(p["g2"], p["be2"], p["m2"], p["v2"])
        w1 = _conv_band_matrix(p["w1_pt"], L, d) * jnp.tile(s1, L)[None, :]
        w2 = _conv_band_matrix(p["w2_pt"], L, d) * jnp.tile(s2, L)[None, :]
        b1 = jnp.tile(p["b1"] * s1 + sh1, L)[None, :]
        b2 = jnp.tile(p["b2"] * s2 + sh2, L)[None, :]
        blocks.append(dict(w1=w1, b1=b1, w2=w2, b2=b2))
    # Linear weight (1, E*L) indexed channel-major (e*L + l) by PyTorch's
    # Flatten of (B, E, L); re-layout to our position-major lanes (l*E + e).
    w_out = params["w_out"]
    w_flat = jnp.transpose(w_out.reshape(E, L), (1, 0)).reshape(1, L * E)
    return dict(embed=params["embed"], blocks=blocks,
                w_flat=w_flat, b_out=params["b_out"])


# --------------------------- parameter init ---------------------------------

def init_params(key, vec_length, n_states, embed_dim, n_blocks, K):
    L, E = vec_length, embed_dim
    keys = jax.random.split(key, 2 + n_blocks)

    # nn.Embedding + kaiming_normal_(nonlinearity='linear'), padding_idx=0
    embed = jax.random.normal(keys[0], (n_states, E), jnp.float32) / jnp.sqrt(E)
    embed = embed.at[0].set(0.0)

    blocks = []
    for blk in range(n_blocks):
        bk = jax.random.split(keys[1 + blk], 12)
        fan_in = E * K
        blocks.append(dict(
            w1_pt=jax.random.normal(bk[0], (E, E, K), jnp.float32) / jnp.sqrt(fan_in),
            b1=0.01 * jax.random.normal(bk[1], (E,), jnp.float32),
            w2_pt=jax.random.normal(bk[2], (E, E, K), jnp.float32) / jnp.sqrt(fan_in),
            b2=0.01 * jax.random.normal(bk[3], (E,), jnp.float32),
            g1=1.0 + 0.1 * jax.random.normal(bk[4], (E,), jnp.float32),
            be1=0.1 * jax.random.normal(bk[5], (E,), jnp.float32),
            m1=0.05 * jax.random.normal(bk[6], (E,), jnp.float32),
            v1=1.0 + 0.1 * jnp.abs(jax.random.normal(bk[7], (E,), jnp.float32)),
            g2=1.0 + 0.1 * jax.random.normal(bk[8], (E,), jnp.float32),
            be2=0.1 * jax.random.normal(bk[9], (E,), jnp.float32),
            m2=0.05 * jax.random.normal(bk[10], (E,), jnp.float32),
            v2=1.0 + 0.1 * jnp.abs(jax.random.normal(bk[11], (E,), jnp.float32)),
        ))

    # nn.Linear(vec_length * embed_dim, 1), xavier_normal_, bias = 0
    k_out = keys[1 + n_blocks]
    w_out = jax.random.normal(k_out, (1, E * L), jnp.float32) * jnp.sqrt(2.0 / (E * L + 1))
    b_out = jnp.zeros((1, 1), jnp.float32)
    return dict(embed=embed, blocks=blocks, w_out=w_out, b_out=b_out)


# --------------------------- pure-JAX reference ------------------------------

def reference_forward(tokens, params, *, K, n_blocks):
    emb = jnp.take(params["embed"], tokens, axis=0)      # (B, L, E)
    h = jnp.transpose(emb, (0, 2, 1))                    # (B, E, L) as in PyTorch
    for blk in range(n_blocks):
        p = params["blocks"][blk]
        d = blk + 1
        pad = (K // 2) * d
        s1, sh1 = _bn_scale_shift(p["g1"], p["be1"], p["m1"], p["v1"])
        s2, sh2 = _bn_scale_shift(p["g2"], p["be2"], p["m2"], p["v2"])

        def conv(x, w_pt, b):
            y = lax.conv_general_dilated(
                x, w_pt, window_strides=(1,), padding=[(pad, pad)],
                rhs_dilation=(d,), dimension_numbers=("NCH", "OIH", "NCH"))
            return y + b.reshape(1, -1, 1)

        identity = h
        y = conv(h, p["w1_pt"], p["b1"])
        y = y * s1.reshape(1, -1, 1) + sh1.reshape(1, -1, 1)
        y = jnp.maximum(y, 0.0)
        y = conv(y, p["w2_pt"], p["b2"])
        y = y * s2.reshape(1, -1, 1) + sh2.reshape(1, -1, 1)
        h = jnp.maximum(y + identity, 0.0)
    flat = h.reshape(h.shape[0], -1)
    return flat @ params["w_out"].T + params["b_out"].reshape(1, 1)


# --------------------------------- main --------------------------------------

if __name__ == "__main__":
    # small, module-consistent shapes
    vec_length, n_states, embed_dim, n_blocks, K = 16, 8, 32, 2, 3
    B = 2

    key = jax.random.PRNGKey(0)
    kp, kx = jax.random.split(key)
    params = init_params(kp, vec_length, n_states, embed_dim, n_blocks, K)
    kparams = build_kernel_params(params, vec_length=vec_length, n_blocks=n_blocks)
    tokens = jax.random.randint(kx, (B, vec_length), 0, n_states, dtype=jnp.int32)

    out = chronologer_forward(tokens, kparams)
    out = jax.block_until_ready(out)

    ref = reference_forward(tokens, params, K=K, n_blocks=n_blocks)
    assert out.shape == (B, 1)
    np.testing.assert_allclose(np.asarray(out), np.asarray(ref),
                               rtol=1e-4, atol=1e-4)
    print("KERNEL_OK")
</pallas_src>

<mosaic_0001>
module attributes {stable_mosaic.version = 11 : i64} {
  func.func @kernel(%arg0: i32, %arg1: memref<8x512xf32, #tpu.memory_space<vmem>>, %arg2: memref<512x512xf32, #tpu.memory_space<vmem>>, %arg3: memref<1x512xf32, #tpu.memory_space<vmem>>, %arg4: memref<512x512xf32, #tpu.memory_space<vmem>>, %arg5: memref<1x512xf32, #tpu.memory_space<vmem>>, %arg6: memref<512x512xf32, #tpu.memory_space<vmem>>, %arg7: memref<1x512xf32, #tpu.memory_space<vmem>>, %arg8: memref<512x512xf32, #tpu.memory_space<vmem>>, %arg9: memref<1x512xf32, #tpu.memory_space<vmem>>, %arg10: memref<1x512xf32, #tpu.memory_space<vmem>>, %arg11: memref<8x1xf32, #tpu.memory_space<vmem>>) attributes {dimension_semantics = [#tpu.dimension_semantics<parallel>], iteration_bounds = array<i64: 1>, scalar_prefetch = 0 : i64, scratch_operands = 0 : i64, tpu.core_type = #tpu.core_type<tc>, window_params = [{transform_indices = @transform_0, window_bounds = array<i64: 8, 512>}, {pipeline_mode = #tpu.pipeline_mode<synchronous>, transform_indices = @transform_1, window_bounds = array<i64: 512, 512>}, {pipeline_mode = #tpu.pipeline_mode<synchronous>, transform_indices = @transform_2, window_bounds = array<i64: 1, 512>}, {pipeline_mode = #tpu.pipeline_mode<synchronous>, transform_indices = @transform_3, window_bounds = array<i64: 512, 512>}, {pipeline_mode = #tpu.pipeline_mode<synchronous>, transform_indices = @transform_4, window_bounds = array<i64: 1, 512>}, {pipeline_mode = #tpu.pipeline_mode<synchronous>, transform_indices = @transform_5, window_bounds = array<i64: 512, 512>}, {pipeline_mode = #tpu.pipeline_mode<synchronous>, transform_indices = @transform_6, window_bounds = array<i64: 1, 512>}, {pipeline_mode = #tpu.pipeline_mode<synchronous>, transform_indices = @transform_7, window_bounds = array<i64: 512, 512>}, {pipeline_mode = #tpu.pipeline_mode<synchronous>, transform_indices = @transform_8, window_bounds = array<i64: 1, 512>}, {pipeline_mode = #tpu.pipeline_mode<synchronous>, transform_indices = @transform_9, window_bounds = array<i64: 1, 512>}, {transform_indices = @transform_10, window_bounds = array<i64: 8, 1>}]} {
    %c0 = arith.constant 0 : index
    %c0_0 = arith.constant 0 : index
    %0 = vector.load %arg1[%c0, %c0_0] : memref<8x512xf32, #tpu.memory_space<vmem>>, vector<8x512xf32>
    %c0_1 = arith.constant 0 : index
    %c0_2 = arith.constant 0 : index
    %1 = vector.load %arg2[%c0_1, %c0_2] : memref<512x512xf32, #tpu.memory_space<vmem>>, vector<512x512xf32>
    %cst = arith.constant dense<0.000000e+00> : vector<8x512xf32>
    %2 = tpu.matmul %0, %1, %cst {dimension_numbers = #tpu.dot_dimension_numbers<[1], [0], [0], [1], [0, 0, 1, 1], [], []>} : vector<8x512xf32>, vector<512x512xf32>, vector<8x512xf32> -> vector<8x512xf32>
    %c0_3 = arith.constant 0 : index
    %c0_4 = arith.constant 0 : index
    %3 = vector.load %arg3[%c0_3, %c0_4] : memref<1x512xf32, #tpu.memory_space<vmem>>, vector<1x512xf32>
    %4 = vector.broadcast %3 : vector<1x512xf32> to vector<8x512xf32>
    %5 = arith.addf %2, %4 : vector<8x512xf32>
    %cst_5 = arith.constant 0.000000e+00 : f32
    %6 = vector.broadcast %cst_5 : f32 to vector<8x512xf32>
    %7 = arith.maximumf %5, %6 : vector<8x512xf32>
    %c0_6 = arith.constant 0 : index
    %c0_7 = arith.constant 0 : index
    %8 = vector.load %arg4[%c0_6, %c0_7] : memref<512x512xf32, #tpu.memory_space<vmem>>, vector<512x512xf32>
    %cst_8 = arith.constant dense<0.000000e+00> : vector<8x512xf32>
    %9 = tpu.matmul %7, %8, %cst_8 {dimension_numbers = #tpu.dot_dimension_numbers<[1], [0], [0], [1], [0, 0, 1, 1], [], []>} : vector<8x512xf32>, vector<512x512xf32>, vector<8x512xf32> -> vector<8x512xf32>
    %c0_9 = arith.constant 0 : index
    %c0_10 = arith.constant 0 : index
    %10 = vector.load %arg5[%c0_9, %c0_10] : memref<1x512xf32, #tpu.memory_space<vmem>>, vector<1x512xf32>
    %11 = vector.broadcast %10 : vector<1x512xf32> to vector<8x512xf32>
    %12 = arith.addf %9, %11 : vector<8x512xf32>
    %13 = arith.addf %12, %0 : vector<8x512xf32>
    %cst_11 = arith.constant 0.000000e+00 : f32
    %14 = vector.broadcast %cst_11 : f32 to vector<8x512xf32>
    %15 = arith.maximumf %13, %14 : vector<8x512xf32>
    %c0_12 = arith.constant 0 : index
    %c0_13 = arith.constant 0 : index
    %16 = vector.load %arg6[%c0_12, %c0_13] : memref<512x512xf32, #tpu.memory_space<vmem>>, vector<512x512xf32>
    %cst_14 = arith.constant dense<0.000000e+00> : vector<8x512xf32>
    %17 = tpu.matmul %15, %16, %cst_14 {dimension_numbers = #tpu.dot_dimension_numbers<[1], [0], [0], [1], [0, 0, 1, 1], [], []>} : vector<8x512xf32>, vector<512x512xf32>, vector<8x512xf32> -> vector<8x512xf32>
    %c0_15 = arith.constant 0 : index
    %c0_16 = arith.constant 0 : index
    %18 = vector.load %arg7[%c0_15, %c0_16] : memref<1x512xf32, #tpu.memory_space<vmem>>, vector<1x512xf32>
    %19 = vector.broadcast %18 : vector<1x512xf32> to vector<8x512xf32>
    %20 = arith.addf %17, %19 : vector<8x512xf32>
    %cst_17 = arith.constant 0.000000e+00 : f32
    %21 = vector.broadcast %cst_17 : f32 to vector<8x512xf32>
    %22 = arith.maximumf %20, %21 : vector<8x512xf32>
    %c0_18 = arith.constant 0 : index
    %c0_19 = arith.constant 0 : index
    %23 = vector.load %arg8[%c0_18, %c0_19] : memref<512x512xf32, #tpu.memory_space<vmem>>, vector<512x512xf32>
    %cst_20 = arith.constant dense<0.000000e+00> : vector<8x512xf32>
    %24 = tpu.matmul %22, %23, %cst_20 {dimension_numbers = #tpu.dot_dimension_numbers<[1], [0], [0], [1], [0, 0, 1, 1], [], []>} : vector<8x512xf32>, vector<512x512xf32>, vector<8x512xf32> -> vector<8x512xf32>
    %c0_21 = arith.constant 0 : index
    %c0_22 = arith.constant 0 : index
    %25 = vector.load %arg9[%c0_21, %c0_22] : memref<1x512xf32, #tpu.memory_space<vmem>>, vector<1x512xf32>
    %26 = vector.broadcast %25 : vector<1x512xf32> to vector<8x512xf32>
    %27 = arith.addf %24, %26 : vector<8x512xf32>
    %28 = arith.addf %27, %15 : vector<8x512xf32>
    %cst_23 = arith.constant 0.000000e+00 : f32
    %29 = vector.broadcast %cst_23 : f32 to vector<8x512xf32>
    %30 = arith.maximumf %28, %29 : vector<8x512xf32>
    %c0_24 = arith.constant 0 : index
    %c0_25 = arith.constant 0 : index
    %31 = vector.load %arg10[%c0_24, %c0_25] : memref<1x512xf32, #tpu.memory_space<vmem>>, vector<1x512xf32>
    %32 = vector.broadcast %31 : vector<1x512xf32> to vector<8x512xf32>
    %33 = arith.mulf %30, %32 : vector<8x512xf32>
    %cst_26 = arith.constant dense<0.000000e+00> : vector<8xf32>
    %34 = vector.multi_reduction <add>, %33, %cst_26 [1] : vector<8x512xf32> to vector<8xf32>
    %35 = vector.shape_cast %34 : vector<8xf32> to vector<8x1xf32>
    %c0_27 = arith.constant 0 : index
    %c0_28 = arith.constant 0 : index
    %36 = vector.load %arg11[%c0_27, %c0_28] : memref<8x1xf32, #tpu.memory_space<vmem>>, vector<8x1xf32>
    tpu.vector_store %arg11[%c0_27, %c0_28], %35 {strides = array<i32>} : memref<8x1xf32, #tpu.memory_space<vmem>>, vector<8x1xf32>,
    return
  }
  func.func @transform_0(%arg0: i32) -> (i32, i32) {
    %c0_i32 = arith.constant 0 : i32
    %c0_i32_0 = arith.constant 0 : i32
    return %arg0, %c0_i32 : i32, i32
  }
  func.func @transform_1(%arg0: i32) -> (i32, i32) {
    %c0_i32 = arith.constant 0 : i32
    %c0_i32_0 = arith.constant 0 : i32
    %c0_i32_1 = arith.constant 0 : i32
    return %c0_i32, %c0_i32_0 : i32, i32
  }
  func.func @transform_2(%arg0: i32) -> (i32, i32) {
    %c0_i32 = arith.constant 0 : i32
    %c0_i32_0 = arith.constant 0 : i32
    %c0_i32_1 = arith.constant 0 : i32
    return %c0_i32, %c0_i32_0 : i32, i32
  }
  func.func @transform_3(%arg0: i32) -> (i32, i32) {
    %c0_i32 = arith.constant 0 : i32
    %c0_i32_0 = arith.constant 0 : i32
    %c0_i32_1 = arith.constant 0 : i32
    return %c0_i32, %c0_i32_0 : i32, i32
  }
  func.func @transform_4(%arg0: i32) -> (i32, i32) {
    %c0_i32 = arith.constant 0 : i32
    %c0_i32_0 = arith.constant 0 : i32
    %c0_i32_1 = arith.constant 0 : i32
    return %c0_i32, %c0_i32_0 : i32, i32
  }
  func.func @transform_5(%arg0: i32) -> (i32, i32) {
    %c0_i32 = arith.constant 0 : i32
    %c0_i32_0 = arith.constant 0 : i32
    %c0_i32_1 = arith.constant 0 : i32
    return %c0_i32, %c0_i32_0 : i32, i32
  }
  func.func @transform_6(%arg0: i32) -> (i32, i32) {
    %c0_i32 = arith.constant 0 : i32
    %c0_i32_0 = arith.constant 0 : i32
    %c0_i32_1 = arith.constant 0 : i32
    return %c0_i32, %c0_i32_0 : i32, i32
  }
  func.func @transform_7(%arg0: i32) -> (i32, i32) {
    %c0_i32 = arith.constant 0 : i32
    %c0_i32_0 = arith.constant 0 : i32
    %c0_i32_1 = arith.constant 0 : i32
    return %c0_i32, %c0_i32_0 : i32, i32
  }
  func.func @transform_8(%arg0: i32) -> (i32, i32) {
    %c0_i32 = arith.constant 0 : i32
    %c0_i32_0 = arith.constant 0 : i32
    %c0_i32_1 = arith.constant 0 : i32
    return %c0_i32, %c0_i32_0 : i32, i32
  }
  func.func @transform_9(%arg0: i32) -> (i32, i32) {
    %c0_i32 = arith.constant 0 : i32
    %c0_i32_0 = arith.constant 0 : i32
    %c0_i32_1 = arith.constant 0 : i32
    return %c0_i32, %c0_i32_0 : i32, i32
  }
  func.func @transform_10(%arg0: i32) -> (i32, i32) {
    %c0_i32 = arith.constant 0 : i32
    %c0_i32_0 = arith.constant 0 : i32
    return %arg0, %c0_i32 : i32, i32
  }
}

</mosaic_0001>

<llo_original>
// kernel: tpu_custom_call.1
$region0: #{tpu_custom_call.1}
  #allocation0 [shape = 'u32[]', space=smem, size = 0x4, offset = 0x4, fixed_abs, tag = 'smem constant byte address 0x4 - core index']
  #allocation1 [shape = 'u32[144,128]{1,0:T(1,128)}', space=vmem, size = 0x12000, scoped, tag = 'internal scratch']
  %s0 = inlined_call_operand.hbm [shape: f32[8,512], index: 0, kind: input, shape index: {}]
  %s1 = inlined_call_operand.hbm [shape: f32[512,512], index: 1, kind: input, shape index: {}]
  %s2 = inlined_call_operand.vmem [shape: f32[1,512], index: 2, kind: input, shape index: {}]
  %s3 = inlined_call_operand.hbm [shape: f32[512,512], index: 3, kind: input, shape index: {}]
  %s4 = inlined_call_operand.vmem [shape: f32[1,512], index: 4, kind: input, shape index: {}]
  %s5 = inlined_call_operand.hbm [shape: f32[512,512], index: 5, kind: input, shape index: {}]
  %s6 = inlined_call_operand.vmem [shape: f32[1,512], index: 6, kind: input, shape index: {}]
  %s7 = inlined_call_operand.hbm [shape: f32[512,512], index: 7, kind: input, shape index: {}]
  %s8 = inlined_call_operand.vmem [shape: f32[1,512], index: 8, kind: input, shape index: {}]
  %s9 = inlined_call_operand.vmem [shape: f32[1,512], index: 9, kind: input, shape index: {}]
  %s10 = inlined_call_operand.vmem [shape: f32[8,1], index: 10, kind: output, shape index: {}]
  %s11 = sld [smem:[#allocation0]]
  $region70: #{tpu_custom_call.1} parent=0
    _
  %s13 = ssub.s32 1, %s11
  %s14 = scalar_select 0, %s13, %s11
  $region1: #{tpu_custom_call.1} parent=0
    #allocation2 [shape = 'u8[16384]{0}', space=vmem, size = 0x4000, scoped, tag = 'input window, operand 0, single buffered']
    #allocation3 [shape = 's32[1]{0}', space=sflag, size = 0x4, scoped, tag = 'scoped memory for tpu_custom_call.1']
    #allocation4 [shape = 'u8[1048576]{0}', space=vmem, size = 0x100000, scoped, tag = 'input window, operand 1, single buffered']
    #allocation5 [shape = 's32[1]{0}', space=sflag, size = 0x4, scoped, tag = 'scoped memory for tpu_custom_call.1']
    #allocation6 [shape = 'u8[1048576]{0}', space=vmem, size = 0x100000, scoped, tag = 'input window, operand 3, single buffered']
    #allocation7 [shape = 'u8[1048576]{0}', space=vmem, size = 0x100000, scoped, tag = 'input window, operand 5, single buffered']
    #allocation8 [shape = 's32[1]{0}', space=sflag, size = 0x4, scoped, tag = 'scoped memory for tpu_custom_call.1']
    #allocation9 [shape = 'u8[1048576]{0}', space=vmem, size = 0x100000, scoped, tag = 'input window, operand 7, single buffered']
    %15 = vsyncpa [#allocation3], 0
    %16 = vsyncpa [#allocation5], 0
    %17 = vsyncpa [#allocation8], 0
    // Predicated region
    $region2: #{tpu_custom_call.1} parent=1 // pred_check
      _
    $region3: #{tpu_custom_call.1} parent=1 // pred_check_branch
      %19 = sbr.rel (0) target = $region5
    $region4: #{tpu_custom_call.1} parent=1 // pred_region
      %s21 = ssub.s32 512, 512
      %22 = vsyncadd [#allocation3], %s21
      %s24 = sshll.u32 [#allocation2], 4
      %s25 = int_to_ptr.vmem [resolvable:$true] %s24
      %27 = dma.hbm_to_vmem [thread:$0]  %s0, 512, %s25, [#allocation3]
    $region5: #{tpu_custom_call.1} parent=1 // pred_fallthru
      _
    // Predicated region
    $region6: #{tpu_custom_call.1} parent=1 // pred_check
      _
    $region7: #{tpu_custom_call.1} parent=1 // pred_check_branch
      %29 = sbr.rel (0) target = $region9
    $region8: #{tpu_custom_call.1} parent=1 // pred_region
      %s31 = ssub.s32 32768, 32768
      %32 = vsyncadd [#allocation5], %s31
      %s33 = sshll.u32 [#allocation4], 4
      %s34 = int_to_ptr.vmem [resolvable:$true] %s33
      %39 = dma.hbm_to_vmem [thread:$0]  %s1, 32768, %s34, [#allocation5], 512, 512, 32
    $region9: #{tpu_custom_call.1} parent=1 // pred_fallthru
      _
    // Predicated region
    $region10: #{tpu_custom_call.1} parent=1 // pred_check
      _
    $region11: #{tpu_custom_call.1} parent=1 // pred_check_branch
      %41 = sbr.rel (0) target = $region13
    $region12: #{tpu_custom_call.1} parent=1 // pred_region
      _
    $region13: #{tpu_custom_call.1} parent=1 // pred_fallthru
      _
    // Predicated region
    $region14: #{tpu_custom_call.1} parent=1 // pred_check
      _
    $region15: #{tpu_custom_call.1} parent=1 // pred_check_branch
      %43 = sbr.rel (0) target = $region17
    $region16: #{tpu_custom_call.1} parent=1 // pred_region
      %s45 = ssub.s32 32768, 32768
      %46 = vsyncadd [#allocation5], %s45
      %s47 = sshll.u32 [#allocation6], 4
      %s48 = int_to_ptr.vmem [resolvable:$true] %s47
      %53 = dma.hbm_to_vmem [thread:$0]  %s3, 32768, %s48, [#allocation5], 512, 512, 32
    $region17: #{tpu_custom_call.1} parent=1 // pred_fallthru
      _
    // Predicated region
    $region18: #{tpu_custom_call.1} parent=1 // pred_check
      _
    $region19: #{tpu_custom_call.1} parent=1 // pred_check_branch
      %55 = sbr.rel (0) target = $region21
    $region20: #{tpu_custom_call.1} parent=1 // pred_region
      _
    $region21: #{tpu_custom_call.1} parent=1 // pred_fallthru
      _
    // Predicated region
    $region22: #{tpu_custom_call.1} parent=1 // pred_check
      _
    $region23: #{tpu_custom_call.1} parent=1 // pred_check_branch
      %57 = sbr.rel (0) target = $region25
    $region24: #{tpu_custom_call.1} parent=1 // pred_region
      %s59 = ssub.s32 32768, 32768
      %60 = vsyncadd [#allocation8], %s59
      %s61 = sshll.u32 [#allocation7], 4
      %s62 = int_to_ptr.vmem [resolvable:$true] %s61
      %67 = dma.hbm_to_vmem [thread:$0]  %s5, 32768, %s62, [#allocation8], 512, 512, 32
    $region25: #{tpu_custom_call.1} parent=1 // pred_fallthru
      _
    // Predicated region
    $region26: #{tpu_custom_call.1} parent=1 // pred_check
      _
    $region27: #{tpu_custom_call.1} parent=1 // pred_check_branch
      %69 = sbr.rel (0) target = $region29
    $region28: #{tpu_custom_call.1} parent=1 // pred_region
      _
    $region29: #{tpu_custom_call.1} parent=1 // pred_fallthru
      _
    // Predicated region
    $region30: #{tpu_custom_call.1} parent=1 // pred_check
      _
    $region31: #{tpu_custom_call.1} parent=1 // pred_check_branch
      %71 = sbr.rel (0) target = $region33
    $region32: #{tpu_custom_call.1} parent=1 // pred_region
      %s73 = ssub.s32 32768, 32768
      %74 = vsyncadd [#allocation8], %s73
      %s75 = sshll.u32 [#allocation9], 4
      %s76 = int_to_ptr.vmem [resolvable:$true] %s75
      %81 = dma.hbm_to_vmem [thread:$0]  %s7, 32768, %s76, [#allocation8], 512, 512, 32
    $region33: #{tpu_custom_call.1} parent=1 // pred_fallthru
      _
    // Predicated region
    $region34: #{tpu_custom_call.1} parent=1 // pred_check
      _
    $region35: #{tpu_custom_call.1} parent=1 // pred_check_branch
      %83 = sbr.rel (0) target = $region37
    $region36: #{tpu_custom_call.1} parent=1 // pred_region
      _
    $region37: #{tpu_custom_call.1} parent=1 // pred_fallthru
      _
    // Predicated region
    $region38: #{tpu_custom_call.1} parent=1 // pred_check
      _
    $region39: #{tpu_custom_call.1} parent=1 // pred_check_branch
      %85 = sbr.rel (0) target = $region41
    $region40: #{tpu_custom_call.1} parent=1 // pred_region
      _
    $region41: #{tpu_custom_call.1} parent=1 // pred_fallthru
      _
    // Predicated region
    $region42: #{tpu_custom_call.1} parent=1 // pred_check
      _
    $region43: #{tpu_custom_call.1} parent=1 // pred_check_branch
      %87 = sbr.rel (0) target = $region45
    $region44: #{tpu_custom_call.1} parent=1 // pred_region
      %88 = dma.done [#allocation3], 512
    $region45: #{tpu_custom_call.1} parent=1 // pred_fallthru
      _
    // Predicated region
    $region46: #{tpu_custom_call.1} parent=1 // pred_check
      _
    $region47: #{tpu_custom_call.1} parent=1 // pred_check_branch
      %90 = sbr.rel (0) target = $region49
    $region48: #{tpu_custom_call.1} parent=1 // pred_region
      %91 = dma.done [#allocation5], 32768
    $region49: #{tpu_custom_call.1} parent=1 // pred_fallthru
      _
    // Predicated region
    $region50: #{tpu_custom_call.1} parent=1 // pred_check
      _
    $region51: #{tpu_custom_call.1} parent=1 // pred_check_branch
      %93 = sbr.rel (0) target = $region53
    $region52: #{tpu_custom_call.1} parent=1 // pred_region
      %94 = dma.done [#allocation5], 32768
    $region53: #{tpu_custom_call.1} parent=1 // pred_fallthru
      _
    // Predicated region
    $region54: #{tpu_custom_call.1} parent=1 // pred_check
      _
    $region55: #{tpu_custom_call.1} parent=1 // pred_check_branch
      %96 = sbr.rel (0) target = $region57
    $region56: #{tpu_custom_call.1} parent=1 // pred_region
      %97 = dma.done [#allocation8], 32768
    $region57: #{tpu_custom_call.1} parent=1 // pred_fallthru
      _
    // Predicated region
    $region58: #{tpu_custom_call.1} parent=1 // pred_check
      _
    $region59: #{tpu_custom_call.1} parent=1 // pred_check_branch
      %99 = sbr.rel (0) target = $region61
    $region60: #{tpu_custom_call.1} parent=1 // pred_region
      %100 = dma.done [#allocation8], 32768
    $region61: #{tpu_custom_call.1} parent=1 // pred_fallthru
      _
    %v101 = vld [vmem:[#allocation2] sm:$0xff]
    %v102 = vld [vmem:[#allocation2 + $0x8] sm:$0xff]
    %v103 = vld [vmem:[#allocation2 + $0x10] sm:$0xff]
    %v104 = vld [vmem:[#allocation2 + $0x18] sm:$0xff]
    %v105 = vld [vmem:[#allocation4] sm:$0xff]
    %v106 = vld [vmem:[#allocation4 + $0x8] sm:$0xff]
    %v107 = vld [vmem:[#allocation4 + $0x10] sm:$0xff]
    %v108 = vld [vmem:[#allocation4 + $0x18] sm:$0xff]
    %v109 = vld [vmem:[#allocation4 + $0x20] sm:$0xff]
    %v110 = vld [vmem:[#allocation4 + $0x28] sm:$0xff]
    %v111 = vld [vmem:[#allocation4 + $0x30] sm:$0xff]
    %v112 = vld [vmem:[#allocation4 + $0x38] sm:$0xff]
    %v113 = vld [vmem:[#allocation4 + $0x40] sm:$0xff]
    %v114 = vld [vmem:[#allocation4 + $0x48] sm:$0xff]
    %v115 = vld [vmem:[#allocation4 + $0x50] sm:$0xff]
    %v116 = vld [vmem:[#allocation4 + $0x58] sm:$0xff]
    %v117 = vld [vmem:[#allocation4 + $0x60] sm:$0xff]
    %v118 = vld [vmem:[#allocation4 + $0x68] sm:$0xff]
    %v119 = vld [vmem:[#allocation4 + $0x70] sm:$0xff]
    %v120 = vld [vmem:[#allocation4 + $0x78] sm:$0xff]
    %v121 = vld [vmem:[#allocation4 + $0x80] sm:$0xff]
    %v122 = vld [vmem:[#allocation4 + $0x88] sm:$0xff]
    %v123 = vld [vmem:[#allocation4 + $0x90] sm:$0xff]
    %v124 = vld [vmem:[#allocation4 + $0x98] sm:$0xff]
    %v125 = vld [vmem:[#allocation4 + $0xa0] sm:$0xff]
    %v126 = vld [vmem:[#allocation4 + $0xa8] sm:$0xff]
    %v127 = vld [vmem:[#allocation4 + $0xb0] sm:$0xff]
    %v128 = vld [vmem:[#allocation4 + $0xb8] sm:$0xff]
    %v129 = vld [vmem:[#allocation4 + $0xc0] sm:$0xff]
    %v130 = vld [vmem:[#allocation4 + $0xc8] sm:$0xff]
    %v131 = vld [vmem:[#allocation4 + $0xd0] sm:$0xff]
    %v132 = vld [vmem:[#allocation4 + $0xd8] sm:$0xff]
    %v133 = vld [vmem:[#allocation4 + $0xe0] sm:$0xff]
    %v134 = vld [vmem:[#allocation4 + $0xe8] sm:$0xff]
    %v135 = vld [vmem:[#allocation4 + $0xf0] sm:$0xff]
    %v136 = vld [vmem:[#allocation4 + $0xf8] sm:$0xff]
    %v137 = vld [vmem:[#allocation4 + $0x100] sm:$0xff]
    %v138 = vld [vmem:[#allocation4 + $0x108] sm:$0xff]
    %v139 = vld [vmem:[#allocation4 + $0x110] sm:$0xff]
    %v140 = vld [vmem:[#allocation4 + $0x118] sm:$0xff]
    %v141 = vld [vmem:[#allocation4 + $0x120] sm:$0xff]
    %v142 = vld [vmem:[#allocation4 + $0x128] sm:$0xff]
    %v143 = vld [vmem:[#allocation4 + $0x130] sm:$0xff]
    %v144 = vld [vmem:[#allocation4 + $0x138] sm:$0xff]
    %v145 = vld [vmem:[#allocation4 + $0x140] sm:$0xff]
    %v146 = vld [vmem:[#allocation4 + $0x148] sm:$0xff]
    %v147 = vld [vmem:[#allocation4 + $0x150] sm:$0xff]
    %v148 = vld [vmem:[#allocation4 + $0x158] sm:$0xff]
    %v149 = vld [vmem:[#allocation4 + $0x160] sm:$0xff]
    %v150 = vld [vmem:[#allocation4 + $0x168] sm:$0xff]
    %v151 = vld [vmem:[#allocation4 + $0x170] sm:$0xff]
    %v152 = vld [vmem:[#allocation4 + $0x178] sm:$0xff]
    %v153 = vld [vmem:[#allocation4 + $0x180] sm:$0xff]
    %v154 = vld [vmem:[#allocation4 + $0x188] sm:$0xff]
    %v155 = vld [vmem:[#allocation4 + $0x190] sm:$0xff]
    %v156 = vld [vmem:[#allocation4 + $0x198] sm:$0xff]
    %v157 = vld [vmem:[#allocation4 + $0x1a0] sm:$0xff]
    %v158 = vld [vmem:[#allocation4 + $0x1a8] sm:$0xff]
    %v159 = vld [vmem:[#allocation4 + $0x1b0] sm:$0xff]
    %v160 = vld [vmem:[#allocation4 + $0x1b8] sm:$0xff]
    %v161 = vld [vmem:[#allocation4 + $0x1c0] sm:$0xff]
    %v162 = vld [vmem:[#allocation4 + $0x1c8] sm:$0xff]
    %v163 = vld [vmem:[#allocation4 + $0x1d0] sm:$0xff]
    %v164 = vld [vmem:[#allocation4 + $0x1d8] sm:$0xff]
    %v165 = vld [vmem:[#allocation4 + $0x1e0] sm:$0xff]
    %v166 = vld [vmem:[#allocation4 + $0x1e8] sm:$0xff]
    %v167 = vld [vmem:[#allocation4 + $0x1f0] sm:$0xff]
    %v168 = vld [vmem:[#allocation4 + $0x1f8] sm:$0xff]
    %v169 = vld [vmem:[#allocation4 + $0x200] sm:$0xff]
    %v170 = vld [vmem:[#allocation4 + $0x208] sm:$0xff]
    %v171 = vld [vmem:[#allocation4 + $0x210] sm:$0xff]
    %v172 = vld [vmem:[#allocation4 + $0x218] sm:$0xff]
    %v173 = vld [vmem:[#allocation4 + $0x220] sm:$0xff]
    %v174 = vld [vmem:[#allocation4 + $0x228] sm:$0xff]
    %v175 = vld [vmem:[#allocation4 + $0x230] sm:$0xff]
    %v176 = vld [vmem:[#allocation4 + $0x238] sm:$0xff]
    %v177 = vld [vmem:[#allocation4 + $0x240] sm:$0xff]
    %v178 = vld [vmem:[#allocation4 + $0x248] sm:$0xff]
    %v179 = vld [vmem:[#allocation4 + $0x250] sm:$0xff]
    %v180 = vld [vmem:[#allocation4 + $0x258] sm:$0xff]
    %v181 = vld [vmem:[#allocation4 + $0x260] sm:$0xff]
    %v182 = vld [vmem:[#allocation4 + $0x268] sm:$0xff]
    %v183 = vld [vmem:[#allocation4 + $0x270] sm:$0xff]
    %v184 = vld [vmem:[#allocation4 + $0x278] sm:$0xff]
    %v185 = vld [vmem:[#allocation4 + $0x280] sm:$0xff]
    %v186 = vld [vmem:[#allocation4 + $0x288] sm:$0xff]
    %v187 = vld [vmem:[#allocation4 + $0x290] sm:$0xff]
    %v188 = vld [vmem:[#allocation4 + $0x298] sm:$0xff]
    %v189 = vld [vmem:[#allocation4 + $0x2a0] sm:$0xff]
    %v190 = vld [vmem:[#allocation4 + $0x2a8] sm:$0xff]
    %v191 = vld [vmem:[#allocation4 + $0x2b0] sm:$0xff]
    %v192 = vld [vmem:[#allocation4 + $0x2b8] sm:$0xff]
    %v193 = vld [vmem:[#allocation4 + $0x2c0] sm:$0xff]
    %v194 = vld [vmem:[#allocation4 + $0x2c8] sm:$0xff]
    %v195 = vld [vmem:[#allocation4 + $0x2d0] sm:$0xff]
    %v196 = vld [vmem:[#allocation4 + $0x2d8] sm:$0xff]
    %v197 = vld [vmem:[#allocation4 + $0x2e0] sm:$0xff]
    %v198 = vld [vmem:[#allocation4 + $0x2e8] sm:$0xff]
    %v199 = vld [vmem:[#allocation4 + $0x2f0] sm:$0xff]
    %v200 = vld [vmem:[#allocation4 + $0x2f8] sm:$0xff]
    %v201 = vld [vmem:[#allocation4 + $0x300] sm:$0xff]
    %v202 = vld [vmem:[#allocation4 + $0x308] sm:$0xff]
    %v203 = vld [vmem:[#allocation4 + $0x310] sm:$0xff]
    %v204 = vld [vmem:[#allocation4 + $0x318] sm:$0xff]
    %v205 = vld [vmem:[#allocation4 + $0x320] sm:$0xff]
    %v206 = vld [vmem:[#allocation4 + $0x328] sm:$0xff]
    %v207 = vld [vmem:[#allocation4 + $0x330] sm:$0xff]
    %v208 = vld [vmem:[#allocation4 + $0x338] sm:$0xff]
    %v209 = vld [vmem:[#allocation4 + $0x340] sm:$0xff]
    %v210 = vld [vmem:[#allocation4 + $0x348] sm:$0xff]
    %v211 = vld [vmem:[#allocation4 + $0x350] sm:$0xff]
    %v212 = vld [vmem:[#allocation4 + $0x358] sm:$0xff]
    %v213 = vld [vmem:[#allocation4 + $0x360] sm:$0xff]
    %v214 = vld [vmem:[#allocation4 + $0x368] sm:$0xff]
    %v215 = vld [vmem:[#allocation4 + $0x370] sm:$0xff]
    %v216 = vld [vmem:[#allocation4 + $0x378] sm:$0xff]
    %v217 = vld [vmem:[#allocation4 + $0x380] sm:$0xff]
    %v218 = vld [vmem:[#allocation4 + $0x388] sm:$0xff]
    %v219 = vld [vmem:[#allocation4 + $0x390] sm:$0xff]
    %v220 = vld [vmem:[#allocation4 + $0x398] sm:$0xff]
    %v221 = vld [vmem:[#allocation4 + $0x3a0] sm:$0xff]
    %v222 = vld [vmem:[#allocation4 + $0x3a8] sm:$0xff]
    %v223 = vld [vmem:[#allocation4 + $0x3b0] sm:$0xff]
    %v224 = vld [vmem:[#allocation4 + $0x3b8] sm:$0xff]
    %v225 = vld [vmem:[#allocation4 + $0x3c0] sm:$0xff]
    %v226 = vld [vmem:[#allocation4 + $0x3c8] sm:$0xff]
    %v227 = vld [vmem:[#allocation4 + $0x3d0] sm:$0xff]
    %v228 = vld [vmem:[#allocation4 + $0x3d8] sm:$0xff]
    %v229 = vld [vmem:[#allocation4 + $0x3e0] sm:$0xff]
    %v230 = vld [vmem:[#allocation4 + $0x3e8] sm:$0xff]
    %v231 = vld [vmem:[#allocation4 + $0x3f0] sm:$0xff]
    %v232 = vld [vmem:[#allocation4 + $0x3f8] sm:$0xff]
    %v233 = vld [vmem:[#allocation4 + $0x400] sm:$0xff]
    %v234 = vld [vmem:[#allocation4 + $0x408] sm:$0xff]
    %v235 = vld [vmem:[#allocation4 + $0x410] sm:$0xff]
    %v236 = vld [vmem:[#allocation4 + $0x418] sm:$0xff]
    %v237 = vld [vmem:[#allocation4 + $0x420] sm:$0xff]
    %v238 = vld [vmem:[#allocation4 + $0x428] sm:$0xff]
    %v239 = vld [vmem:[#allocation4 + $0x430] sm:$0xff]
    %v240 = vld [vmem:[#allocation4 + $0x438] sm:$0xff]
    %v241 = vld [vmem:[#allocation4 + $0x440] sm:$0xff]
    %v242 = vld [vmem:[#allocation4 + $0x448] sm:$0xff]
    %v243 = vld [vmem:[#allocation4 + $0x450] sm:$0xff]
    %v244 = vld [vmem:[#allocation4 + $0x458] sm:$0xff]
    %v245 = vld [vmem:[#allocation4 + $0x460] sm:$0xff]
    %v246 = vld [vmem:[#allocation4 + $0x468] sm:$0xff]
    %v247 = vld [vmem:[#allocation4 + $0x470] sm:$0xff]
    %v248 = vld [vmem:[#allocation4 + $0x478] sm:$0xff]
    %v249 = vld [vmem:[#allocation4 + $0x480] sm:$0xff]
    %v250 = vld [vmem:[#allocation4 + $0x488] sm:$0xff]
    %v251 = vld [vmem:[#allocation4 + $0x490] sm:$0xff]
    %v252 = vld [vmem:[#allocation4 + $0x498] sm:$0xff]
    %v253 = vld [vmem:[#allocation4 + $0x4a0] sm:$0xff]
    %v254 = vld [vmem:[#allocation4 + $0x4a8] sm:$0xff]
    %v255 = vld [vmem:[#allocation4 + $0x4b0] sm:$0xff]
    %v256 = vld [vmem:[#allocation4 + $0x4b8] sm:$0xff]
    %v257 = vld [vmem:[#allocation4 + $0x4c0] sm:$0xff]
    %v258 = vld [vmem:[#allocation4 + $0x4c8] sm:$0xff]
    %v259 = vld [vmem:[#allocation4 + $0x4d0] sm:$0xff]
    %v260 = vld [vmem:[#allocation4 + $0x4d8] sm:$0xff]
    %v261 = vld [vmem:[#allocation4 + $0x4e0] sm:$0xff]
    %v262 = vld [vmem:[#allocation4 + $0x4e8] sm:$0xff]
    %v263 = vld [vmem:[#allocation4 + $0x4f0] sm:$0xff]
    %v264 = vld [vmem:[#allocation4 + $0x4f8] sm:$0xff]
    %v265 = vld [vmem:[#allocation4 + $0x500] sm:$0xff]
    %v266 = vld [vmem:[#allocation4 + $0x508] sm:$0xff]
    %v267 = vld [vmem:[#allocation4 + $0x510] sm:$0xff]
    %v268 = vld [vmem:[#allocation4 + $0x518] sm:$0xff]
    %v269 = vld [vmem:[#allocation4 + $0x520] sm:$0xff]
    %v270 = vld [vmem:[#allocation4 + $0x528] sm:$0xff]
    %v271 = vld [vmem:[#allocation4 + $0x530] sm:$0xff]
    %v272 = vld [vmem:[#allocation4 + $0x538] sm:$0xff]
    %v273 = vld [vmem:[#allocation4 + $0x540] sm:$0xff]
    %v274 = vld [vmem:[#allocation4 + $0x548] sm:$0xff]
    %v275 = vld [vmem:[#allocation4 + $0x550] sm:$0xff]
    %v276 = vld [vmem:[#allocation4 + $0x558] sm:$0xff]
    %v277 = vld [vmem:[#allocation4 + $0x560] sm:$0xff]
    %v278 = vld [vmem:[#allocation4 + $0x568] sm:$0xff]
    %v279 = vld [vmem:[#allocation4 + $0x570] sm:$0xff]
    %v280 = vld [vmem:[#allocation4 + $0x578] sm:$0xff]
    %v281 = vld [vmem:[#allocation4 + $0x580] sm:$0xff]
    %v282 = vld [vmem:[#allocation4 + $0x588] sm:$0xff]
    %v283 = vld [vmem:[#allocation4 + $0x590] sm:$0xff]
    %v284 = vld [vmem:[#allocation4 + $0x598] sm:$0xff]
    %v285 = vld [vmem:[#allocation4 + $0x5a0] sm:$0xff]
    %v286 = vld [vmem:[#allocation4 + $0x5a8] sm:$0xff]
    %v287 = vld [vmem:[#allocation4 + $0x5b0] sm:$0xff]
    %v288 = vld [vmem:[#allocation4 + $0x5b8] sm:$0xff]
    %v289 = vld [vmem:[#allocation4 + $0x5c0] sm:$0xff]
    %v290 = vld [vmem:[#allocation4 + $0x5c8] sm:$0xff]
    %v291 = vld [vmem:[#allocation4 + $0x5d0] sm:$0xff]
    %v292 = vld [vmem:[#allocation4 + $0x5d8] sm:$0xff]
    %v293 = vld [vmem:[#allocation4 + $0x5e0] sm:$0xff]
    %v294 = vld [vmem:[#allocation4 + $0x5e8] sm:$0xff]
    %v295 = vld [vmem:[#allocation4 + $0x5f0] sm:$0xff]
    %v296 = vld [vmem:[#allocation4 + $0x5f8] sm:$0xff]
    %v297 = vld [vmem:[#allocation4 + $0x600] sm:$0xff]
    %v298 = vld [vmem:[#allocation4 + $0x608] sm:$0xff]
    %v299 = vld [vmem:[#allocation4 + $0x610] sm:$0xff]
    %v300 = vld [vmem:[#allocation4 + $0x618] sm:$0xff]
    %v301 = vld [vmem:[#allocation4 + $0x620] sm:$0xff]
    %v302 = vld [vmem:[#allocation4 + $0x628] sm:$0xff]
    %v303 = vld [vmem:[#allocation4 + $0x630] sm:$0xff]
    %v304 = vld [vmem:[#allocation4 + $0x638] sm:$0xff]
    %v305 = vld [vmem:[#allocation4 + $0x640] sm:$0xff]
    %v306 = vld [vmem:[#allocation4 + $0x648] sm:$0xff]
    %v307 = vld [vmem:[#allocation4 + $0x650] sm:$0xff]
    %v308 = vld [vmem:[#allocation4 + $0x658] sm:$0xff]
    %v309 = vld [vmem:[#allocation4 + $0x660] sm:$0xff]
    %v310 = vld [vmem:[#allocation4 + $0x668] sm:$0xff]
    %v311 = vld [vmem:[#allocation4 + $0x670] sm:$0xff]
    %v312 = vld [vmem:[#allocation4 + $0x678] sm:$0xff]
    %v313 = vld [vmem:[#allocation4 + $0x680] sm:$0xff]
    %v314 = vld [vmem:[#allocation4 + $0x688] sm:$0xff]
    %v315 = vld [vmem:[#allocation4 + $0x690] sm:$0xff]
    %v316 = vld [vmem:[#allocation4 + $0x698] sm:$0xff]
    %v317 = vld [vmem:[#allocation4 + $0x6a0] sm:$0xff]
    %v318 = vld [vmem:[#allocation4 + $0x6a8] sm:$0xff]
    %v319 = vld [vmem:[#allocation4 + $0x6b0] sm:$0xff]
    %v320 = vld [vmem:[#allocation4 + $0x6b8] sm:$0xff]
    %v321 = vld [vmem:[#allocation4 + $0x6c0] sm:$0xff]
    %v322 = vld [vmem:[#allocation4 + $0x6c8] sm:$0xff]
    %v323 = vld [vmem:[#allocation4 + $0x6d0] sm:$0xff]
    %v324 = vld [vmem:[#allocation4 + $0x6d8] sm:$0xff]
    %v325 = vld [vmem:[#allocation4 + $0x6e0] sm:$0xff]
    %v326 = vld [vmem:[#allocation4 + $0x6e8] sm:$0xff]
    %v327 = vld [vmem:[#allocation4 + $0x6f0] sm:$0xff]
    %v328 = vld [vmem:[#allocation4 + $0x6f8] sm:$0xff]
    %v329 = vld [vmem:[#allocation4 + $0x700] sm:$0xff]
    %v330 = vld [vmem:[#allocation4 + $0x708] sm:$0xff]
    %v331 = vld [vmem:[#allocation4 + $0x710] sm:$0xff]
    %v332 = vld [vmem:[#allocation4 + $0x718] sm:$0xff]
    %v333 = vld [vmem:[#allocation4 + $0x720] sm:$0xff]
    %v334 = vld [vmem:[#allocation4 + $0x728] sm:$0xff]
    %v335 = vld [vmem:[#allocation4 + $0x730] sm:$0xff]
    %v336 = vld [vmem:[#allocation4 + $0x738] sm:$0xff]
    %v337 = vld [vmem:[#allocation4 + $0x740] sm:$0xff]
    %v338 = vld [vmem:[#allocation4 + $0x748] sm:$0xff]
    %v339 = vld [vmem:[#allocation4 + $0x750] sm:$0xff]
    %v340 = vld [vmem:[#allocation4 + $0x758] sm:$0xff]
    %v341 = vld [vmem:[#allocation4 + $0x760] sm:$0xff]
    %v342 = vld [vmem:[#allocation4 + $0x768] sm:$0xff]
    %v343 = vld [vmem:[#allocation4 + $0x770] sm:$0xff]
    %v344 = vld [vmem:[#allocation4 + $0x778] sm:$0xff]
    %v345 = vld [vmem:[#allocation4 + $0x780] sm:$0xff]
    %v346 = vld [vmem:[#allocation4 + $0x788] sm:$0xff]
    %v347 = vld [vmem:[#allocation4 + $0x790] sm:$0xff]
    %v348 = vld [vmem:[#allocation4 + $0x798] sm:$0xff]
    %v349 = vld [vmem:[#allocation4 + $0x7a0] sm:$0xff]
    %v350 = vld [vmem:[#allocation4 + $0x7a8] sm:$0xff]
    %v351 = vld [vmem:[#allocation4 + $0x7b0] sm:$0xff]
    %v352 = vld [vmem:[#allocation4 + $0x7b8] sm:$0xff]
    %v353 = vld [vmem:[#allocation4 + $0x7c0] sm:$0xff]
    %v354 = vld [vmem:[#allocation4 + $0x7c8] sm:$0xff]
    %v355 = vld [vmem:[#allocation4 + $0x7d0] sm:$0xff]
    %v356 = vld [vmem:[#allocation4 + $0x7d8] sm:$0xff]
    %v357 = vld [vmem:[#allocation4 + $0x7e0] sm:$0xff]
    %v358 = vld [vmem:[#allocation4 + $0x7e8] sm:$0xff]
    %v359 = vld [vmem:[#allocation4 + $0x7f0] sm:$0xff]
    %v360 = vld [vmem:[#allocation4 + $0x7f8] sm:$0xff]
    %v361 = vld [vmem:[%s2] sm:$0xf]
    %v363 = vlaneseq
    %v364 = vshrl.u32 %v363, 7
    %v365 = vsub.s32 0, %v364
    %v366 = vrot.slane %v361, %v365
    %v367 = vlaneseq
    %v368 = vshrl.u32 %v367, 7
    %v369 = vsub.s32 1, %v368
    %v370 = vrot.slane %v361, %v369
    %v371 = vlaneseq
    %v372 = vshrl.u32 %v371, 7
    %v373 = vsub.s32 2, %v372
    %v374 = vrot.slane %v361, %v373
    %v375 = vlaneseq
    %v376 = vshrl.u32 %v375, 7
    %v377 = vsub.s32 3, %v376
    %v378 = vrot.slane %v361, %v377
    %383 = vmatprep.subr.mxu0 %v106
    %384 = vmatpush1.msra.mxu0 %v105
    %385 = vmatprep.subr.mxu0 %v110
    %386 = vmatpush1.msra.mxu0 %v109
    %387 = vmatprep.subr.mxu0 %v114
    %388 = vmatpush1.msra.mxu0 %v113
    %389 = vmatprep.subr.mxu0 %v118
    %390 = vmatpush1.msra.mxu0 %v117
    %391 = vmatprep.subr.mxu0 %v122
    %392 = vmatpush1.msra.mxu0 %v121
    %393 = vmatprep.subr.mxu0 %v126
    %394 = vmatpush1.msra.mxu0 %v125
    %395 = vmatprep.subr.mxu0 %v130
    %396 = vmatpush1.msra.mxu0 %v129
    %397 = vmatprep.subr.mxu0 %v134
    %398 = vmatpush1.msra.mxu0 %v133
    %399 = vmatprep.subr.mxu0 %v138
    %400 = vmatpush1.msra.mxu0 %v137
    %401 = vmatprep.subr.mxu0 %v142
    %402 = vmatpush1.msra.mxu0 %v141
    %403 = vmatprep.subr.mxu0 %v146
    %404 = vmatpush1.msra.mxu0 %v145
    %405 = vmatprep.subr.mxu0 %v150
    %406 = vmatpush1.msra.mxu0 %v149
    %407 = vmatprep.subr.mxu0 %v154
    %408 = vmatpush1.msra.mxu0 %v153
    %409 = vmatprep.subr.mxu0 %v158
    %410 = vmatpush1.msra.mxu0 %v157
    %411 = vmatprep.subr.mxu0 %v162
    %412 = vmatpush1.msra.mxu0 %v161
    %413 = vmatprep.subr.mxu0 %v166
    %414 = vmatpush1.msra.mxu0 %v165
    %415 = vmatprep.subr.mxu0 %v170
    %416 = vmatpush1.msra.mxu0 %v169
    %417 = vmatprep.subr.mxu0 %v174
    %418 = vmatpush1.msra.mxu0 %v173
    %419 = vmatprep.subr.mxu0 %v178
    %420 = vmatpush1.msra.mxu0 %v177
    %421 = vmatprep.subr.mxu0 %v182
    %422 = vmatpush1.msra.mxu0 %v181
    %423 = vmatprep.subr.mxu0 %v186
    %424 = vmatpush1.msra.mxu0 %v185
    %425 = vmatprep.subr.mxu0 %v190
    %426 = vmatpush1.msra.mxu0 %v189
    %427 = vmatprep.subr.mxu0 %v194
    %428 = vmatpush1.msra.mxu0 %v193
    %429 = vmatprep.subr.mxu0 %v198
    %430 = vmatpush1.msra.mxu0 %v197
    %431 = vmatprep.subr.mxu0 %v202
    %432 = vmatpush1.msra.mxu0 %v201
    %433 = vmatprep.subr.mxu0 %v206
    %434 = vmatpush1.msra.mxu0 %v205
    %435 = vmatprep.subr.mxu0 %v210
    %436 = vmatpush1.msra.mxu0 %v209
    %437 = vmatprep.subr.mxu0 %v214
    %438 = vmatpush1.msra.mxu0 %v213
    %439 = vmatprep.subr.mxu0 %v218
    %440 = vmatpush1.msra.mxu0 %v217
    %441 = vmatprep.subr.mxu0 %v222
    %442 = vmatpush1.msra.mxu0 %v221
    %443 = vmatprep.subr.mxu0 %v226
    %444 = vmatpush1.msra.mxu0 %v225
    %445 = vmatprep.subr.mxu0 %v230
    %446 = vmatpush1.msra.mxu0 %v229
    %447 = vmatprep.mubr.f32.mxu0 %v102
    %448 = vmatmul.mubr.f32.gmra.mrb[0].mxu0 %v101
    %v449 = vpop.f32.mrb[0].mxu0
    %v450 = vadd.f32 %v366, %v449
    %v451 = vpop.f32.mrb[0].mxu0
    %v452 = vadd.f32 %v370, %v451
    %453 = vdwg.mxu0
    %454 = vmatprep.subr.mxu0 %v234
    %455 = vmatpush1.msra.mxu0 %v233
    %456 = vmatprep.subr.mxu0 %v238
    %457 = vmatpush1.msra.mxu0 %v237
    %458 = vmatprep.subr.mxu0 %v242
    %459 = vmatpush1.msra.mxu0 %v241
    %460 = vmatprep.subr.mxu0 %v246
    %461 = vmatpush1.msra.mxu0 %v245
    %462 = vmatprep.subr.mxu0 %v250
    %463 = vmatpush1.msra.mxu0 %v249
    %464 = vmatprep.subr.mxu0 %v254
    %465 = vmatpush1.msra.mxu0 %v253
    %466 = vmatprep.subr.mxu0 %v258
    %467 = vmatpush1.msra.mxu0 %v257
    %468 = vmatprep.subr.mxu0 %v262
    %469 = vmatpush1.msra.mxu0 %v261
    %470 = vmatprep.subr.mxu0 %v266
    %471 = vmatpush1.msra.mxu0 %v265
    %472 = vmatprep.subr.mxu0 %v270
    %473 = vmatpush1.msra.mxu0 %v269
    %474 = vmatprep.subr.mxu0 %v274
    %475 = vmatpush1.msra.mxu0 %v273
    %476 = vmatprep.subr.mxu0 %v278
    %477 = vmatpush1.msra.mxu0 %v277
    %478 = vmatprep.subr.mxu0 %v282
    %479 = vmatpush1.msra.mxu0 %v281
    %480 = vmatprep.subr.mxu0 %v286
    %481 = vmatpush1.msra.mxu0 %v285
    %482 = vmatprep.subr.mxu0 %v290
    %483 = vmatpush1.msra.mxu0 %v289
    %484 = vmatprep.subr.mxu0 %v294
    %485 = vmatpush1.msra.mxu0 %v293
    %486 = vmatprep.subr.mxu0 %v298
    %487 = vmatpush1.msra.mxu0 %v297
    %488 = vmatprep.subr.mxu0 %v302
    %489 = vmatpush1.msra.mxu0 %v301
    %490 = vmatprep.subr.mxu0 %v306
    %491 = vmatpush1.msra.mxu0 %v305
    %492 = vmatprep.subr.mxu0 %v310
    %493 = vmatpush1.msra.mxu0 %v309
    %494 = vmatprep.subr.mxu0 %v314
    %495 = vmatpush1.msra.mxu0 %v313
    %496 = vmatprep.subr.mxu0 %v318
    %497 = vmatpush1.msra.mxu0 %v317
    %498 = vmatprep.subr.mxu0 %v322
    %499 = vmatpush1.msra.mxu0 %v321
    %500 = vmatprep.subr.mxu0 %v326
    %501 = vmatpush1.msra.mxu0 %v325
    %502 = vmatprep.subr.mxu0 %v330
    %503 = vmatpush1.msra.mxu0 %v329
    %504 = vmatprep.subr.mxu0 %v334
    %505 = vmatpush1.msra.mxu0 %v333
    %506 = vmatprep.subr.mxu0 %v338
    %507 = vmatpush1.msra.mxu0 %v337
    %508 = vmatprep.subr.mxu0 %v342
    %509 = vmatpush1.msra.mxu0 %v341
    %510 = vmatprep.subr.mxu0 %v346
    %511 = vmatpush1.msra.mxu0 %v345
    %512 = vmatprep.subr.mxu0 %v350
    %513 = vmatpush1.msra.mxu0 %v349
    %514 = vmatprep.subr.mxu0 %v354
    %515 = vmatpush1.msra.mxu0 %v353
    %516 = vmatprep.subr.mxu0 %v358
    %517 = vmatpush1.msra.mxu0 %v357
    %518 = vmatprep.mubr.f32.mxu0 %v104
    %519 = vmatmul.mubr.f32.gmra.mrb[0].mxu0 %v103
    %v520 = vpop.f32.mrb[0].mxu0
    %v521 = vadd.f32 %v450, %v520
    %v522 = vpop.f32.mrb[0].mxu0
    %v523 = vadd.f32 %v452, %v522
    %524 = vdwg.mxu0
    %525 = vmatprep.subr.mxu0 %v108
    %526 = vmatpush1.msra.mxu0 %v107
    %527 = vmatprep.subr.mxu0 %v112
    %528 = vmatpush1.msra.mxu0 %v111
    %529 = vmatprep.subr.mxu0 %v116
    %530 = vmatpush1.msra.mxu0 %v115
    %531 = vmatprep.subr.mxu0 %v120
    %532 = vmatpush1.msra.mxu0 %v119
    %533 = vmatprep.subr.mxu0 %v124
    %534 = vmatpush1.msra.mxu0 %v123
    %535 = vmatprep.subr.mxu0 %v128
    %536 = vmatpush1.msra.mxu0 %v127
    %537 = vmatprep.subr.mxu0 %v132
    %538 = vmatpush1.msra.mxu0 %v131
    %539 = vmatprep.subr.mxu0 %v136
    %540 = vmatpush1.msra.mxu0 %v135
    %541 = vmatprep.subr.mxu0 %v140
    %542 = vmatpush1.msra.mxu0 %v139
    %543 = vmatprep.subr.mxu0 %v144
    %544 = vmatpush1.msra.mxu0 %v143
    %545 = vmatprep.subr.mxu0 %v148
    %546 = vmatpush1.msra.mxu0 %v147
    %547 = vmatprep.subr.mxu0 %v152
    %548 = vmatpush1.msra.mxu0 %v151
    %549 = vmatprep.subr.mxu0 %v156
    %550 = vmatpush1.msra.mxu0 %v155
    %551 = vmatprep.subr.mxu0 %v160
    %552 = vmatpush1.msra.mxu0 %v159
    %553 = vmatprep.subr.mxu0 %v164
    %554 = vmatpush1.msra.mxu0 %v163
    %555 = vmatprep.subr.mxu0 %v168
    %556 = vmatpush1.msra.mxu0 %v167
    %557 = vmatprep.subr.mxu0 %v172
    %558 = vmatpush1.msra.mxu0 %v171
    %559 = vmatprep.subr.mxu0 %v176
    %560 = vmatpush1.msra.mxu0 %v175
    %561 = vmatprep.subr.mxu0 %v180
    %562 = vmatpush1.msra.mxu0 %v179
    %563 = vmatprep.subr.mxu0 %v184
    %564 = vmatpush1.msra.mxu0 %v183
    %565 = vmatprep.subr.mxu0 %v188
    %566 = vmatpush1.msra.mxu0 %v187
    %567 = vmatprep.subr.mxu0 %v192
    %568 = vmatpush1.msra.mxu0 %v191
    %569 = vmatprep.subr.mxu0 %v196
    %570 = vmatpush1.msra.mxu0 %v195
    %571 = vmatprep.subr.mxu0 %v200
    %572 = vmatpush1.msra.mxu0 %v199
    %573 = vmatprep.subr.mxu0 %v204
    %574 = vmatpush1.msra.mxu0 %v203
    %575 = vmatprep.subr.mxu0 %v208
    %576 = vmatpush1.msra.mxu0 %v207
    %577 = vmatprep.subr.mxu0 %v212
    %578 = vmatpush1.msra.mxu0 %v211
    %579 = vmatprep.subr.mxu0 %v216
    %580 = vmatpush1.msra.mxu0 %v215
    %581 = vmatprep.subr.mxu0 %v220
    %582 = vmatpush1.msra.mxu0 %v219
    %583 = vmatprep.subr.mxu0 %v224
    %584 = vmatpush1.msra.mxu0 %v223
    %585 = vmatprep.subr.mxu0 %v228
    %586 = vmatpush1.msra.mxu0 %v227
    %587 = vmatprep.subr.mxu0 %v232
    %588 = vmatpush1.msra.mxu0 %v231
    %589 = vmatprep.mubr.f32.mxu0 %v102
    %590 = vmatmul.mubr.f32.gmra.mrb[0].mxu0 %v101
    %v591 = vpop.f32.mrb[0].mxu0
    %v592 = vadd.f32 %v374, %v591
    %v593 = vpop.f32.mrb[0].mxu0
    %v594 = vadd.f32 %v378, %v593
    %595 = vdwg.mxu0
    %596 = vmatprep.subr.mxu0 %v236
    %597 = vmatpush1.msra.mxu0 %v235
    %598 = vmatprep.subr.mxu0 %v240
    %599 = vmatpush1.msra.mxu0 %v239
    %600 = vmatprep.subr.mxu0 %v244
    %601 = vmatpush1.msra.mxu0 %v243
    %602 = vmatprep.subr.mxu0 %v248
    %603 = vmatpush1.msra.mxu0 %v247
    %604 = vmatprep.subr.mxu0 %v252
    %605 = vmatpush1.msra.mxu0 %v251
    %606 = vmatprep.subr.mxu0 %v256
    %607 = vmatpush1.msra.mxu0 %v255
    %608 = vmatprep.subr.mxu0 %v260
    %609 = vmatpush1.msra.mxu0 %v259
    %610 = vmatprep.subr.mxu0 %v264
    %611 = vmatpush1.msra.mxu0 %v263
    %612 = vmatprep.subr.mxu0 %v268
    %613 = vmatpush1.msra.mxu0 %v267
    %614 = vmatprep.subr.mxu0 %v272
    %615 = vmatpush1.msra.mxu0 %v271
    %616 = vmatprep.subr.mxu0 %v276
    %617 = vmatpush1.msra.mxu0 %v275
    %618 = vmatprep.subr.mxu0 %v280
    %619 = vmatpush1.msra.mxu0 %v279
    %620 = vmatprep.subr.mxu0 %v284
    %621 = vmatpush1.msra.mxu0 %v283
    %622 = vmatprep.subr.mxu0 %v288
    %623 = vmatpush1.msra.mxu0 %v287
    %624 = vmatprep.subr.mxu0 %v292
    %625 = vmatpush1.msra.mxu0 %v291
    %626 = vmatprep.subr.mxu0 %v296
    %627 = vmatpush1.msra.mxu0 %v295
    %628 = vmatprep.subr.mxu0 %v300
    %629 = vmatpush1.msra.mxu0 %v299
    %630 = vmatprep.subr.mxu0 %v304
    %631 = vmatpush1.msra.mxu0 %v303
    %632 = vmatprep.subr.mxu0 %v308
    %633 = vmatpush1.msra.mxu0 %v307
    %634 = vmatprep.subr.mxu0 %v312
    %635 = vmatpush1.msra.mxu0 %v311
    %636 = vmatprep.subr.mxu0 %v316
    %637 = vmatpush1.msra.mxu0 %v315
    %638 = vmatprep.subr.mxu0 %v320
    %639 = vmatpush1.msra.mxu0 %v319
    %640 = vmatprep.subr.mxu0 %v324
    %641 = vmatpush1.msra.mxu0 %v323
    %642 = vmatprep.subr.mxu0 %v328
    %643 = vmatpush1.msra.mxu0 %v327
    %644 = vmatprep.subr.mxu0 %v332
    %645 = vmatpush1.msra.mxu0 %v331
    %646 = vmatprep.subr.mxu0 %v336
    %647 = vmatpush1.msra.mxu0 %v335
    %648 = vmatprep.subr.mxu0 %v340
    %649 = vmatpush1.msra.mxu0 %v339
    %650 = vmatprep.subr.mxu0 %v344
    %651 = vmatpush1.msra.mxu0 %v343
    %652 = vmatprep.subr.mxu0 %v348
    %653 = vmatpush1.msra.mxu0 %v347
    %654 = vmatprep.subr.mxu0 %v352
    %655 = vmatpush1.msra.mxu0 %v351
    %656 = vmatprep.subr.mxu0 %v356
    %657 = vmatpush1.msra.mxu0 %v355
    %658 = vmatprep.subr.mxu0 %v360
    %659 = vmatpush1.msra.mxu0 %v359
    %660 = vmatprep.mubr.f32.mxu0 %v104
    %661 = vmatmul.mubr.f32.gmra.mrb[0].mxu0 %v103
    %v662 = vpop.f32.mrb[0].mxu0
    %v663 = vadd.f32 %v592, %v662
    %v664 = vpop.f32.mrb[0].mxu0
    %v665 = vadd.f32 %v594, %v664
    %666 = vdwg.mxu0
    %v667 = vmax.f32 %v521, 0.0
    %v668 = vmax.f32 %v523, 0.0
    %v669 = vmax.f32 %v663, 0.0
    %v670 = vmax.f32 %v665, 0.0
    %v671 = vld [vmem:[#allocation6] sm:$0xff]
    %v672 = vld [vmem:[#allocation6 + $0x8] sm:$0xff]
    %v673 = vld [vmem:[#allocation6 + $0x10] sm:$0xff]
    %v674 = vld [vmem:[#allocation6 + $0x18] sm:$0xff]
    %v675 = vld [vmem:[#allocation6 + $0x20] sm:$0xff]
    %v676 = vld [vmem:[#allocation6 + $0x28] sm:$0xff]
    %v677 = vld [vmem:[#allocation6 + $0x30] sm:$0xff]
    %v678 = vld [vmem:[#allocation6 + $0x38] sm:$0xff]
    %v679 = vld [vmem:[#allocation6 + $0x40] sm:$0xff]
    %v680 = vld [vmem:[#allocation6 + $0x48] sm:$0xff]
    %v681 = vld [vmem:[#allocation6 + $0x50] sm:$0xff]
    %v682 = vld [vmem:[#allocation6 + $0x58] sm:$0xff]
    %v683 = vld [vmem:[#allocation6 + $0x60] sm:$0xff]
    %v684 = vld [vmem:[#allocation6 + $0x68] sm:$0xff]
    %v685 = vld [vmem:[#allocation6 + $0x70] sm:$0xff]
    %v686 = vld [vmem:[#allocation6 + $0x78] sm:$0xff]
    %v687 = vld [vmem:[#allocation6 + $0x80] sm:$0xff]
    %v688 = vld [vmem:[#allocation6 + $0x88] sm:$0xff]
    %v689 = vld [vmem:[#allocation6 + $0x90] sm:$0xff]
    %v690 = vld [vmem:[#allocation6 + $0x98] sm:$0xff]
    %v691 = vld [vmem:[#allocation6 + $0xa0] sm:$0xff]
    %v692 = vld [vmem:[#allocation6 + $0xa8] sm:$0xff]
    %v693 = vld [vmem:[#allocation6 + $0xb0] sm:$0xff]
    %v694 = vld [vmem:[#allocation6 + $0xb8] sm:$0xff]
    %v695 = vld [vmem:[#allocation6 + $0xc0] sm:$0xff]
    %v696 = vld [vmem:[#allocation6 + $0xc8] sm:$0xff]
    %v697 = vld [vmem:[#allocation6 + $0xd0] sm:$0xff]
    %v698 = vld [vmem:[#allocation6 + $0xd8] sm:$0xff]
    %v699 = vld [vmem:[#allocation6 + $0xe0] sm:$0xff]
    %v700 = vld [vmem:[#allocation6 + $0xe8] sm:$0xff]
    %v701 = vld [vmem:[#allocation6 + $0xf0] sm:$0xff]
    %v702 = vld [vmem:[#allocation6 + $0xf8] sm:$0xff]
    %v703 = vld [vmem:[#allocation6 + $0x100] sm:$0xff]
    %v704 = vld [vmem:[#allocation6 + $0x108] sm:$0xff]
    %v705 = vld [vmem:[#allocation6 + $0x110] sm:$0xff]
    %v706 = vld [vmem:[#allocation6 + $0x118] sm:$0xff]
    %v707 = vld [vmem:[#allocation6 + $0x120] sm:$0xff]
    %v708 = vld [vmem:[#allocation6 + $0x128] sm:$0xff]
    %v709 = vld [vmem:[#allocation6 + $0x130] sm:$0xff]
    %v710 = vld [vmem:[#allocation6 + $0x138] sm:$0xff]
    %v711 = vld [vmem:[#allocation6 + $0x140] sm:$0xff]
    %v712 = vld [vmem:[#allocation6 + $0x148] sm:$0xff]
    %v713 = vld [vmem:[#allocation6 + $0x150] sm:$0xff]
    %v714 = vld [vmem:[#allocation6 + $0x158] sm:$0xff]
    %v715 = vld [vmem:[#allocation6 + $0x160] sm:$0xff]
    %v716 = vld [vmem:[#allocation6 + $0x168] sm:$0xff]
    %v717 = vld [vmem:[#allocation6 + $0x170] sm:$0xff]
    %v718 = vld [vmem:[#allocation6 + $0x178] sm:$0xff]
    %v719 = vld [vmem:[#allocation6 + $0x180] sm:$0xff]
    %v720 = vld [vmem:[#allocation6 + $0x188] sm:$0xff]
    %v721 = vld [vmem:[#allocation6 + $0x190] sm:$0xff]
    %v722 = vld [vmem:[#allocation6 + $0x198] sm:$0xff]
    %v723 = vld [vmem:[#allocation6 + $0x1a0] sm:$0xff]
    %v724 = vld [vmem:[#allocation6 + $0x1a8] sm:$0xff]
    %v725 = vld [vmem:[#allocation6 + $0x1b0] sm:$0xff]
    %v726 = vld [vmem:[#allocation6 + $0x1b8] sm:$0xff]
    %v727 = vld [vmem:[#allocation6 + $0x1c0] sm:$0xff]
    %v728 = vld [vmem:[#allocation6 + $0x1c8] sm:$0xff]
    %v729 = vld [vmem:[#allocation6 + $0x1d0] sm:$0xff]
    %v730 = vld [vmem:[#allocation6 + $0x1d8] sm:$0xff]
    %v731 = vld [vmem:[#allocation6 + $0x1e0] sm:$0xff]
    %v732 = vld [vmem:[#allocation6 + $0x1e8] sm:$0xff]
    %v733 = vld [vmem:[#allocation6 + $0x1f0] sm:$0xff]
    %v734 = vld [vmem:[#allocation6 + $0x1f8] sm:$0xff]
    %v735 = vld [vmem:[#allocation6 + $0x200] sm:$0xff]
    %v736 = vld [vmem:[#allocation6 + $0x208] sm:$0xff]
    %v737 = vld [vmem:[#allocation6 + $0x210] sm:$0xff]
    %v738 = vld [vmem:[#allocation6 + $0x218] sm:$0xff]
    %v739 = vld [vmem:[#allocation6 + $0x220] sm:$0xff]
    %v740 = vld [vmem:[#allocation6 + $0x228] sm:$0xff]
    %v741 = vld [vmem:[#allocation6 + $0x230] sm:$0xff]
    %v742 = vld [vmem:[#allocation6 + $0x238] sm:$0xff]
    %v743 = vld [vmem:[#allocation6 + $0x240] sm:$0xff]
    %v744 = vld [vmem:[#allocation6 + $0x248] sm:$0xff]
    %v745 = vld [vmem:[#allocation6 + $0x250] sm:$0xff]
    %v746 = vld [vmem:[#allocation6 + $0x258] sm:$0xff]
    %v747 = vld [vmem:[#allocation6 + $0x260] sm:$0xff]
    %v748 = vld [vmem:[#allocation6 + $0x268] sm:$0xff]
    %v749 = vld [vmem:[#allocation6 + $0x270] sm:$0xff]
    %v750 = vld [vmem:[#allocation6 + $0x278] sm:$0xff]
    %v751 = vld [vmem:[#allocation6 + $0x280] sm:$0xff]
    %v752 = vld [vmem:[#allocation6 + $0x288] sm:$0xff]
    %v753 = vld [vmem:[#allocation6 + $0x290] sm:$0xff]
    %v754 = vld [vmem:[#allocation6 + $0x298] sm:$0xff]
    %v755 = vld [vmem:[#allocation6 + $0x2a0] sm:$0xff]
    %v756 = vld [vmem:[#allocation6 + $0x2a8] sm:$0xff]
    %v757 = vld [vmem:[#allocation6 + $0x2b0] sm:$0xff]
    %v758 = vld [vmem:[#allocation6 + $0x2b8] sm:$0xff]
    %v759 = vld [vmem:[#allocation6 + $0x2c0] sm:$0xff]
    %v760 = vld [vmem:[#allocation6 + $0x2c8] sm:$0xff]
    %v761 = vld [vmem:[#allocation6 + $0x2d0] sm:$0xff]
    %v762 = vld [vmem:[#allocation6 + $0x2d8] sm:$0xff]
    %v763 = vld [vmem:[#allocation6 + $0x2e0] sm:$0xff]
    %v764 = vld [vmem:[#allocation6 + $0x2e8] sm:$0xff]
    %v765 = vld [vmem:[#allocation6 + $0x2f0] sm:$0xff]
    %v766 = vld [vmem:[#allocation6 + $0x2f8] sm:$0xff]
    %v767 = vld [vmem:[#allocation6 + $0x300] sm:$0xff]
    %v768 = vld [vmem:[#allocation6 + $0x308] sm:$0xff]
    %v769 = vld [vmem:[#allocation6 + $0x310] sm:$0xff]
    %v770 = vld [vmem:[#allocation6 + $0x318] sm:$0xff]
    %v771 = vld [vmem:[#allocation6 + $0x320] sm:$0xff]
    %v772 = vld [vmem:[#allocation6 + $0x328] sm:$0xff]
    %v773 = vld [vmem:[#allocation6 + $0x330] sm:$0xff]
    %v774 = vld [vmem:[#allocation6 + $0x338] sm:$0xff]
    %v775 = vld [vmem:[#allocation6 + $0x340] sm:$0xff]
    %v776 = vld [vmem:[#allocation6 + $0x348] sm:$0xff]
    %v777 = vld [vmem:[#allocation6 + $0x350] sm:$0xff]
    %v778 = vld [vmem:[#allocation6 + $0x358] sm:$0xff]
    %v779 = vld [vmem:[#allocation6 + $0x360] sm:$0xff]
    %v780 = vld [vmem:[#allocation6 + $0x368] sm:$0xff]
    %v781 = vld [vmem:[#allocation6 + $0x370] sm:$0xff]
    %v782 = vld [vmem:[#allocation6 + $0x378] sm:$0xff]
    %v783 = vld [vmem:[#allocation6 + $0x380] sm:$0xff]
    %v784 = vld [vmem:[#allocation6 + $0x388] sm:$0xff]
    %v785 = vld [vmem:[#allocation6 + $0x390] sm:$0xff]
    %v786 = vld [vmem:[#allocation6 + $0x398] sm:$0xff]
    %v787 = vld [vmem:[#allocation6 + $0x3a0] sm:$0xff]
    %v788 = vld [vmem:[#allocation6 + $0x3a8] sm:$0xff]
    %v789 = vld [vmem:[#allocation6 + $0x3b0] sm:$0xff]
    %v790 = vld [vmem:[#allocation6 + $0x3b8] sm:$0xff]
    %v791 = vld [vmem:[#allocation6 + $0x3c0] sm:$0xff]
    %v792 = vld [vmem:[#allocation6 + $0x3c8] sm:$0xff]
    %v793 = vld [vmem:[#allocation6 + $0x3d0] sm:$0xff]
    %v794 = vld [vmem:[#allocation6 + $0x3d8] sm:$0xff]
    %v795 = vld [vmem:[#allocation6 + $0x3e0] sm:$0xff]
    %v796 = vld [vmem:[#allocation6 + $0x3e8] sm:$0xff]
    %v797 = vld [vmem:[#allocation6 + $0x3f0] sm:$0xff]
    %v798 = vld [vmem:[#allocation6 + $0x3f8] sm:$0xff]
    %v799 = vld [vmem:[#allocation6 + $0x400] sm:$0xff]
    %v800 = vld [vmem:[#allocation6 + $0x408] sm:$0xff]
    %v801 = vld [vmem:[#allocation6 + $0x410] sm:$0xff]
    %v802 = vld [vmem:[#allocation6 + $0x418] sm:$0xff]
    %v803 = vld [vmem:[#allocation6 + $0x420] sm:$0xff]
    %v804 = vld [vmem:[#allocation6 + $0x428] sm:$0xff]
    %v805 = vld [vmem:[#allocation6 + $0x430] sm:$0xff]
    %v806 = vld [vmem:[#allocation6 + $0x438] sm:$0xff]
    %v807 = vld [vmem:[#allocation6 + $0x440] sm:$0xff]
    %v808 = vld [vmem:[#allocation6 + $0x448] sm:$0xff]
    %v809 = vld [vmem:[#allocation6 + $0x450] sm:$0xff]
    %v810 = vld [vmem:[#allocation6 + $0x458] sm:$0xff]
    %v811 = vld [vmem:[#allocation6 + $0x460] sm:$0xff]
    %v812 = vld [vmem:[#allocation6 + $0x468] sm:$0xff]
    %v813 = vld [vmem:[#allocation6 + $0x470] sm:$0xff]
    %v814 = vld [vmem:[#allocation6 + $0x478] sm:$0xff]
    %v815 = vld [vmem:[#allocation6 + $0x480] sm:$0xff]
    %v816 = vld [vmem:[#allocation6 + $0x488] sm:$0xff]
    %v817 = vld [vmem:[#allocation6 + $0x490] sm:$0xff]
    %v818 = vld [vmem:[#allocation6 + $0x498] sm:$0xff]
    %v819 = vld [vmem:[#allocation6 + $0x4a0] sm:$0xff]
    %v820 = vld [vmem:[#allocation6 + $0x4a8] sm:$0xff]
    %v821 = vld [vmem:[#allocation6 + $0x4b0] sm:$0xff]
    %v822 = vld [vmem:[#allocation6 + $0x4b8] sm:$0xff]
    %v823 = vld [vmem:[#allocation6 + $0x4c0] sm:$0xff]
    %v824 = vld [vmem:[#allocation6 + $0x4c8] sm:$0xff]
    %v825 = vld [vmem:[#allocation6 + $0x4d0] sm:$0xff]
    %v826 = vld [vmem:[#allocation6 + $0x4d8] sm:$0xff]
    %v827 = vld [vmem:[#allocation6 + $0x4e0] sm:$0xff]
    %v828 = vld [vmem:[#allocation6 + $0x4e8] sm:$0xff]
    %v829 = vld [vmem:[#allocation6 + $0x4f0] sm:$0xff]
    %v830 = vld [vmem:[#allocation6 + $0x4f8] sm:$0xff]
    %v831 = vld [vmem:[#allocation6 + $0x500] sm:$0xff]
    %v832 = vld [vmem:[#allocation6 + $0x508] sm:$0xff]
    %v833 = vld [vmem:[#allocation6 + $0x510] sm:$0xff]
    %v834 = vld [vmem:[#allocation6 + $0x518] sm:$0xff]
    %v835 = vld [vmem:[#allocation6 + $0x520] sm:$0xff]
    %v836 = vld [vmem:[#allocation6 + $0x528] sm:$0xff]
    %v837 = vld [vmem:[#allocation6 + $0x530] sm:$0xff]
    %v838 = vld [vmem:[#allocation6 + $0x538] sm:$0xff]
    %v839 = vld [vmem:[#allocation6 + $0x540] sm:$0xff]
    %v840 = vld [vmem:[#allocation6 + $0x548] sm:$0xff]
    %v841 = vld [vmem:[#allocation6 + $0x550] sm:$0xff]
    %v842 = vld [vmem:[#allocation6 + $0x558] sm:$0xff]
    %v843 = vld [vmem:[#allocation6 + $0x560] sm:$0xff]
    %v844 = vld [vmem:[#allocation6 + $0x568] sm:$0xff]
    %v845 = vld [vmem:[#allocation6 + $0x570] sm:$0xff]
    %v846 = vld [vmem:[#allocation6 + $0x578] sm:$0xff]
    %v847 = vld [vmem:[#allocation6 + $0x580] sm:$0xff]
    %v848 = vld [vmem:[#allocation6 + $0x588] sm:$0xff]
    %v849 = vld [vmem:[#allocation6 + $0x590] sm:$0xff]
    %v850 = vld [vmem:[#allocation6 + $0x598] sm:$0xff]
    %v851 = vld [vmem:[#allocation6 + $0x5a0] sm:$0xff]
    %v852 = vld [vmem:[#allocation6 + $0x5a8] sm:$0xff]
    %v853 = vld [vmem:[#allocation6 + $0x5b0] sm:$0xff]
    %v854 = vld [vmem:[#allocation6 + $0x5b8] sm:$0xff]
    %v855 = vld [vmem:[#allocation6 + $0x5c0] sm:$0xff]
    %v856 = vld [vmem:[#allocation6 + $0x5c8] sm:$0xff]
    %v857 = vld [vmem:[#allocation6 + $0x5d0] sm:$0xff]
    %v858 = vld [vmem:[#allocation6 + $0x5d8] sm:$0xff]
    %v859 = vld [vmem:[#allocation6 + $0x5e0] sm:$0xff]
    %v860 = vld [vmem:[#allocation6 + $0x5e8] sm:$0xff]
    %v861 = vld [vmem:[#allocation6 + $0x5f0] sm:$0xff]
    %v862 = vld [vmem:[#allocation6 + $0x5f8] sm:$0xff]
    %v863 = vld [vmem:[#allocation6 + $0x600] sm:$0xff]
    %v864 = vld [vmem:[#allocation6 + $0x608] sm:$0xff]
    %v865 = vld [vmem:[#allocation6 + $0x610] sm:$0xff]
    %v866 = vld [vmem:[#allocation6 + $0x618] sm:$0xff]
    %v867 = vld [vmem:[#allocation6 + $0x620] sm:$0xff]
    %v868 = vld [vmem:[#allocation6 + $0x628] sm:$0xff]
    %v869 = vld [vmem:[#allocation6 + $0x630] sm:$0xff]
    %v870 = vld [vmem:[#allocation6 + $0x638] sm:$0xff]
    %v871 = vld [vmem:[#allocation6 + $0x640] sm:$0xff]
    %v872 = vld [vmem:[#allocation6 + $0x648] sm:$0xff]
    %v873 = vld [vmem:[#allocation6 + $0x650] sm:$0xff]
    %v874 = vld [vmem:[#allocation6 + $0x658] sm:$0xff]
    %v875 = vld [vmem:[#allocation6 + $0x660] sm:$0xff]
    %v876 = vld [vmem:[#allocation6 + $0x668] sm:$0xff]
    %v877 = vld [vmem:[#allocation6 + $0x670] sm:$0xff]
    %v878 = vld [vmem:[#allocation6 + $0x678] sm:$0xff]
    %v879 = vld [vmem:[#allocation6 + $0x680] sm:$0xff]
    %v880 = vld [vmem:[#allocation6 + $0x688] sm:$0xff]
    %v881 = vld [vmem:[#allocation6 + $0x690] sm:$0xff]
    %v882 = vld [vmem:[#allocation6 + $0x698] sm:$0xff]
    %v883 = vld [vmem:[#allocation6 + $0x6a0] sm:$0xff]
    %v884 = vld [vmem:[#allocation6 + $0x6a8] sm:$0xff]
    %v885 = vld [vmem:[#allocation6 + $0x6b0] sm:$0xff]
    %v886 = vld [vmem:[#allocation6 + $0x6b8] sm:$0xff]
    %v887 = vld [vmem:[#allocation6 + $0x6c0] sm:$0xff]
    %v888 = vld [vmem:[#allocation6 + $0x6c8] sm:$0xff]
    %v889 = vld [vmem:[#allocation6 + $0x6d0] sm:$0xff]
    %v890 = vld [vmem:[#allocation6 + $0x6d8] sm:$0xff]
    %v891 = vld [vmem:[#allocation6 + $0x6e0] sm:$0xff]
    %v892 = vld [vmem:[#allocation6 + $0x6e8] sm:$0xff]
    %v893 = vld [vmem:[#allocation6 + $0x6f0] sm:$0xff]
    %v894 = vld [vmem:[#allocation6 + $0x6f8] sm:$0xff]
    %v895 = vld [vmem:[#allocation6 + $0x700] sm:$0xff]
    %v896 = vld [vmem:[#allocation6 + $0x708] sm:$0xff]
    %v897 = vld [vmem:[#allocation6 + $0x710] sm:$0xff]
    %v898 = vld [vmem:[#allocation6 + $0x718] sm:$0xff]
    %v899 = vld [vmem:[#allocation6 + $0x720] sm:$0xff]
    %v900 = vld [vmem:[#allocation6 + $0x728] sm:$0xff]
    %v901 = vld [vmem:[#allocation6 + $0x730] sm:$0xff]
    %v902 = vld [vmem:[#allocation6 + $0x738] sm:$0xff]
    %v903 = vld [vmem:[#allocation6 + $0x740] sm:$0xff]
    %v904 = vld [vmem:[#allocation6 + $0x748] sm:$0xff]
    %v905 = vld [vmem:[#allocation6 + $0x750] sm:$0xff]
    %v906 = vld [vmem:[#allocation6 + $0x758] sm:$0xff]
    %v907 = vld [vmem:[#allocation6 + $0x760] sm:$0xff]
    %v908 = vld [vmem:[#allocation6 + $0x768] sm:$0xff]
    %v909 = vld [vmem:[#allocation6 + $0x770] sm:$0xff]
    %v910 = vld [vmem:[#allocation6 + $0x778] sm:$0xff]
    %v911 = vld [vmem:[#allocation6 + $0x780] sm:$0xff]
    %v912 = vld [vmem:[#allocation6 + $0x788] sm:$0xff]
    %v913 = vld [vmem:[#allocation6 + $0x790] sm:$0xff]
    %v914 = vld [vmem:[#allocation6 + $0x798] sm:$0xff]
    %v915 = vld [vmem:[#allocation6 + $0x7a0] sm:$0xff]
    %v916 = vld [vmem:[#allocation6 + $0x7a8] sm:$0xff]
    %v917 = vld [vmem:[#allocation6 + $0x7b0] sm:$0xff]
    %v918 = vld [vmem:[#allocation6 + $0x7b8] sm:$0xff]
    %v919 = vld [vmem:[#allocation6 + $0x7c0] sm:$0xff]
    %v920 = vld [vmem:[#allocation6 + $0x7c8] sm:$0xff]
    %v921 = vld [vmem:[#allocation6 + $0x7d0] sm:$0xff]
    %v922 = vld [vmem:[#allocation6 + $0x7d8] sm:$0xff]
    %v923 = vld [vmem:[#allocation6 + $0x7e0] sm:$0xff]
    %v924 = vld [vmem:[#allocation6 + $0x7e8] sm:$0xff]
    %v925 = vld [vmem:[#allocation6 + $0x7f0] sm:$0xff]
    %v926 = vld [vmem:[#allocation6 + $0x7f8] sm:$0xff]
    %v927 = vld [vmem:[%s4] sm:$0xf]
    %v929 = vlaneseq
    %v930 = vshrl.u32 %v929, 7
    %v931 = vsub.s32 0, %v930
    %v932 = vrot.slane %v927, %v931
    %v933 = vlaneseq
    %v934 = vshrl.u32 %v933, 7
    %v935 = vsub.s32 1, %v934
    %v936 = vrot.slane %v927, %v935
    %v937 = vlaneseq
    %v938 = vshrl.u32 %v937, 7
    %v939 = vsub.s32 2, %v938
    %v940 = vrot.slane %v927, %v939
    %v941 = vlaneseq
    %v942 = vshrl.u32 %v941, 7
    %v943 = vsub.s32 3, %v942
    %v944 = vrot.slane %v927, %v943
    %949 = vmatprep.subr.mxu0 %v672
    %950 = vmatpush1.msra.mxu0 %v671
    %951 = vmatprep.subr.mxu0 %v676
    %952 = vmatpush1.msra.mxu0 %v675
    %953 = vmatprep.subr.mxu0 %v680
    %954 = vmatpush1.msra.mxu0 %v679
    %955 = vmatprep.subr.mxu0 %v684
    %956 = vmatpush1.msra.mxu0 %v683
    %957 = vmatprep.subr.mxu0 %v688
    %958 = vmatpush1.msra.mxu0 %v687
    %959 = vmatprep.subr.mxu0 %v692
    %960 = vmatpush1.msra.mxu0 %v691
    %961 = vmatprep.subr.mxu0 %v696
    %962 = vmatpush1.msra.mxu0 %v695
    %963 = vmatprep.subr.mxu0 %v700
    %964 = vmatpush1.msra.mxu0 %v699
    %965 = vmatprep.subr.mxu0 %v704
    %966 = vmatpush1.msra.mxu0 %v703
    %967 = vmatprep.subr.mxu0 %v708
    %968 = vmatpush1.msra.mxu0 %v707
    %969 = vmatprep.subr.mxu0 %v712
    %970 = vmatpush1.msra.mxu0 %v711
    %971 = vmatprep.subr.mxu0 %v716
    %972 = vmatpush1.msra.mxu0 %v715
    %973 = vmatprep.subr.mxu0 %v720
    %974 = vmatpush1.msra.mxu0 %v719
    %975 = vmatprep.subr.mxu0 %v724
    %976 = vmatpush1.msra.mxu0 %v723
    %977 = vmatprep.subr.mxu0 %v728
    %978 = vmatpush1.msra.mxu0 %v727
    %979 = vmatprep.subr.mxu0 %v732
    %980 = vmatpush1.msra.mxu0 %v731
    %981 = vmatprep.subr.mxu0 %v736
    %982 = vmatpush1.msra.mxu0 %v735
    %983 = vmatprep.subr.mxu0 %v740
    %984 = vmatpush1.msra.mxu0 %v739
    %985 = vmatprep.subr.mxu0 %v744
    %986 = vmatpush1.msra.mxu0 %v743
    %987 = vmatprep.subr.mxu0 %v748
    %988 = vmatpush1.msra.mxu0 %v747
    %989 = vmatprep.subr.mxu0 %v752
    %990 = vmatpush1.msra.mxu0 %v751
    %991 = vmatprep.subr.mxu0 %v756
    %992 = vmatpush1.msra.mxu0 %v755
    %993 = vmatprep.subr.mxu0 %v760
    %994 = vmatpush1.msra.mxu0 %v759
    %995 = vmatprep.subr.mxu0 %v764
    %996 = vmatpush1.msra.mxu0 %v763
    %997 = vmatprep.subr.mxu0 %v768
    %998 = vmatpush1.msra.mxu0 %v767
    %999 = vmatprep.subr.mxu0 %v772
    %1000 = vmatpush1.msra.mxu0 %v771
    %1001 = vmatprep.subr.mxu0 %v776
    %1002 = vmatpush1.msra.mxu0 %v775
    %1003 = vmatprep.subr.mxu0 %v780
    %1004 = vmatpush1.msra.mxu0 %v779
    %1005 = vmatprep.subr.mxu0 %v784
    %1006 = vmatpush1.msra.mxu0 %v783
    %1007 = vmatprep.subr.mxu0 %v788
    %1008 = vmatpush1.msra.mxu0 %v787
    %1009 = vmatprep.subr.mxu0 %v792
    %1010 = vmatpush1.msra.mxu0 %v791
    %1011 = vmatprep.subr.mxu0 %v796
    %1012 = vmatpush1.msra.mxu0 %v795
    %1013 = vmatprep.mubr.f32.mxu0 %v668
    %1014 = vmatmul.mubr.f32.gmra.mrb[0].mxu0 %v667
    %v1015 = vpop.f32.mrb[0].mxu0
    %v1016 = vadd.f32 %v932, %v1015
    %v1017 = vpop.f32.mrb[0].mxu0
    %v1018 = vadd.f32 %v936, %v1017
    %1019 = vdwg.mxu0
    %1020 = vmatprep.subr.mxu0 %v800
    %1021 = vmatpush1.msra.mxu0 %v799
    %1022 = vmatprep.subr.mxu0 %v804
    %1023 = vmatpush1.msra.mxu0 %v803
    %1024 = vmatprep.subr.mxu0 %v808
    %1025 = vmatpush1.msra.mxu0 %v807
    %1026 = vmatprep.subr.mxu0 %v812
    %1027 = vmatpush1.msra.mxu0 %v811
    %1028 = vmatprep.subr.mxu0 %v816
    %1029 = vmatpush1.msra.mxu0 %v815
    %1030 = vmatprep.subr.mxu0 %v820
    %1031 = vmatpush1.msra.mxu0 %v819
    %1032 = vmatprep.subr.mxu0 %v824
    %1033 = vmatpush1.msra.mxu0 %v823
    %1034 = vmatprep.subr.mxu0 %v828
    %1035 = vmatpush1.msra.mxu0 %v827
    %1036 = vmatprep.subr.mxu0 %v832
    %1037 = vmatpush1.msra.mxu0 %v831
    %1038 = vmatprep.subr.mxu0 %v836
    %1039 = vmatpush1.msra.mxu0 %v835
    %1040 = vmatprep.subr.mxu0 %v840
    %1041 = vmatpush1.msra.mxu0 %v839
    %1042 = vmatprep.subr.mxu0 %v844
    %1043 = vmatpush1.msra.mxu0 %v843
    %1044 = vmatprep.subr.mxu0 %v848
    %1045 = vmatpush1.msra.mxu0 %v847
    %1046 = vmatprep.subr.mxu0 %v852
    %1047 = vmatpush1.msra.mxu0 %v851
    %1048 = vmatprep.subr.mxu0 %v856
    %1049 = vmatpush1.msra.mxu0 %v855
    %1050 = vmatprep.subr.mxu0 %v860
    %1051 = vmatpush1.msra.mxu0 %v859
    %1052 = vmatprep.subr.mxu0 %v864
    %1053 = vmatpush1.msra.mxu0 %v863
    %1054 = vmatprep.subr.mxu0 %v868
    %1055 = vmatpush1.msra.mxu0 %v867
    %1056 = vmatprep.subr.mxu0 %v872
    %1057 = vmatpush1.msra.mxu0 %v871
    %1058 = vmatprep.subr.mxu0 %v876
    %1059 = vmatpush1.msra.mxu0 %v875
    %1060 = vmatprep.subr.mxu0 %v880
    %1061 = vmatpush1.msra.mxu0 %v879
    %1062 = vmatprep.subr.mxu0 %v884
    %1063 = vmatpush1.msra.mxu0 %v883
    %1064 = vmatprep.subr.mxu0 %v888
    %1065 = vmatpush1.msra.mxu0 %v887
    %1066 = vmatprep.subr.mxu0 %v892
    %1067 = vmatpush1.msra.mxu0 %v891
    %1068 = vmatprep.subr.mxu0 %v896
    %1069 = vmatpush1.msra.mxu0 %v895
    %1070 = vmatprep.subr.mxu0 %v900
    %1071 = vmatpush1.msra.mxu0 %v899
    %1072 = vmatprep.subr.mxu0 %v904
    %1073 = vmatpush1.msra.mxu0 %v903
    %1074 = vmatprep.subr.mxu0 %v908
    %1075 = vmatpush1.msra.mxu0 %v907
    %1076 = vmatprep.subr.mxu0 %v912
    %1077 = vmatpush1.msra.mxu0 %v911
    %1078 = vmatprep.subr.mxu0 %v916
    %1079 = vmatpush1.msra.mxu0 %v915
    %1080 = vmatprep.subr.mxu0 %v920
    %1081 = vmatpush1.msra.mxu0 %v919
    %1082 = vmatprep.subr.mxu0 %v924
    %1083 = vmatpush1.msra.mxu0 %v923
    %1084 = vmatprep.mubr.f32.mxu0 %v670
    %1085 = vmatmul.mubr.f32.gmra.mrb[0].mxu0 %v669
    %v1086 = vpop.f32.mrb[0].mxu0
    %v1087 = vadd.f32 %v1016, %v1086
    %v1088 = vpop.f32.mrb[0].mxu0
    %v1089 = vadd.f32 %v1018, %v1088
    %1090 = vdwg.mxu0
    %1091 = vmatprep.subr.mxu0 %v674
    %1092 = vmatpush1.msra.mxu0 %v673
    %1093 = vmatprep.subr.mxu0 %v678
    %1094 = vmatpush1.msra.mxu0 %v677
    %1095 = vmatprep.subr.mxu0 %v682
    %1096 = vmatpush1.msra.mxu0 %v681
    %1097 = vmatprep.subr.mxu0 %v686
    %1098 = vmatpush1.msra.mxu0 %v685
    %1099 = vmatprep.subr.mxu0 %v690
    %1100 = vmatpush1.msra.mxu0 %v689
    %1101 = vmatprep.subr.mxu0 %v694
    %1102 = vmatpush1.msra.mxu0 %v693
    %1103 = vmatprep.subr.mxu0 %v698
    %1104 = vmatpush1.msra.mxu0 %v697
    %1105 = vmatprep.subr.mxu0 %v702
    %1106 = vmatpush1.msra.mxu0 %v701
    %1107 = vmatprep.subr.mxu0 %v706
    %1108 = vmatpush1.msra.mxu0 %v705
    %1109 = vmatprep.subr.mxu0 %v710
    %1110 = vmatpush1.msra.mxu0 %v709
    %1111 = vmatprep.subr.mxu0 %v714
    %1112 = vmatpush1.msra.mxu0 %v713
    %1113 = vmatprep.subr.mxu0 %v718
    %1114 = vmatpush1.msra.mxu0 %v717
    %1115 = vmatprep.subr.mxu0 %v722
    %1116 = vmatpush1.msra.mxu0 %v721
    %1117 = vmatprep.subr.mxu0 %v726
    %1118 = vmatpush1.msra.mxu0 %v725
    %1119 = vmatprep.subr.mxu0 %v730
    %1120 = vmatpush1.msra.mxu0 %v729
    %1121 = vmatprep.subr.mxu0 %v734
    %1122 = vmatpush1.msra.mxu0 %v733
    %1123 = vmatprep.subr.mxu0 %v738
    %1124 = vmatpush1.msra.mxu0 %v737
    %1125 = vmatprep.subr.mxu0 %v742
    %1126 = vmatpush1.msra.mxu0 %v741
    %1127 = vmatprep.subr.mxu0 %v746
    %1128 = vmatpush1.msra.mxu0 %v745
    %1129 = vmatprep.subr.mxu0 %v750
    %1130 = vmatpush1.msra.mxu0 %v749
    %1131 = vmatprep.subr.mxu0 %v754
    %1132 = vmatpush1.msra.mxu0 %v753
    %1133 = vmatprep.subr.mxu0 %v758
    %1134 = vmatpush1.msra.mxu0 %v757
    %1135 = vmatprep.subr.mxu0 %v762
    %1136 = vmatpush1.msra.mxu0 %v761
    %1137 = vmatprep.subr.mxu0 %v766
    %1138 = vmatpush1.msra.mxu0 %v765
    %1139 = vmatprep.subr.mxu0 %v770
    %1140 = vmatpush1.msra.mxu0 %v769
    %1141 = vmatprep.subr.mxu0 %v774
    %1142 = vmatpush1.msra.mxu0 %v773
    %1143 = vmatprep.subr.mxu0 %v778
    %1144 = vmatpush1.msra.mxu0 %v777
    %1145 = vmatprep.subr.mxu0 %v782
    %1146 = vmatpush1.msra.mxu0 %v781
    %1147 = vmatprep.subr.mxu0 %v786
    %1148 = vmatpush1.msra.mxu0 %v785
    %1149 = vmatprep.subr.mxu0 %v790
    %1150 = vmatpush1.msra.mxu0 %v789
    %1151 = vmatprep.subr.mxu0 %v794
    %1152 = vmatpush1.msra.mxu0 %v793
    %1153 = vmatprep.subr.mxu0 %v798
    %1154 = vmatpush1.msra.mxu0 %v797
    %1155 = vmatprep.mubr.f32.mxu0 %v668
    %1156 = vmatmul.mubr.f32.gmra.mrb[0].mxu0 %v667
    %v1157 = vpop.f32.mrb[0].mxu0
    %v1158 = vadd.f32 %v940, %v1157
    %v1159 = vpop.f32.mrb[0].mxu0
    %v1160 = vadd.f32 %v944, %v1159
    %1161 = vdwg.mxu0
    %1162 = vmatprep.subr.mxu0 %v802
    %1163 = vmatpush1.msra.mxu0 %v801
    %1164 = vmatprep.subr.mxu0 %v806
    %1165 = vmatpush1.msra.mxu0 %v805
    %1166 = vmatprep.subr.mxu0 %v810
    %1167 = vmatpush1.msra.mxu0 %v809
    %1168 = vmatprep.subr.mxu0 %v814
    %1169 = vmatpush1.msra.mxu0 %v813
    %1170 = vmatprep.subr.mxu0 %v818
    %1171 = vmatpush1.msra.mxu0 %v817
    %1172 = vmatprep.subr.mxu0 %v822
    %1173 = vmatpush1.msra.mxu0 %v821
    %1174 = vmatprep.subr.mxu0 %v826
    %1175 = vmatpush1.msra.mxu0 %v825
    %1176 = vmatprep.subr.mxu0 %v830
    %1177 = vmatpush1.msra.mxu0 %v829
    %1178 = vmatprep.subr.mxu0 %v834
    %1179 = vmatpush1.msra.mxu0 %v833
    %1180 = vmatprep.subr.mxu0 %v838
    %1181 = vmatpush1.msra.mxu0 %v837
    %1182 = vmatprep.subr.mxu0 %v842
    %1183 = vmatpush1.msra.mxu0 %v841
    %1184 = vmatprep.subr.mxu0 %v846
    %1185 = vmatpush1.msra.mxu0 %v845
    %1186 = vmatprep.subr.mxu0 %v850
    %1187 = vmatpush1.msra.mxu0 %v849
    %1188 = vmatprep.subr.mxu0 %v854
    %1189 = vmatpush1.msra.mxu0 %v853
    %1190 = vmatprep.subr.mxu0 %v858
    %1191 = vmatpush1.msra.mxu0 %v857
    %1192 = vmatprep.subr.mxu0 %v862
    %1193 = vmatpush1.msra.mxu0 %v861
    %1194 = vmatprep.subr.mxu0 %v866
    %1195 = vmatpush1.msra.mxu0 %v865
    %1196 = vmatprep.subr.mxu0 %v870
    %1197 = vmatpush1.msra.mxu0 %v869
    %1198 = vmatprep.subr.mxu0 %v874
    %1199 = vmatpush1.msra.mxu0 %v873
    %1200 = vmatprep.subr.mxu0 %v878
    %1201 = vmatpush1.msra.mxu0 %v877
    %1202 = vmatprep.subr.mxu0 %v882
    %1203 = vmatpush1.msra.mxu0 %v881
    %1204 = vmatprep.subr.mxu0 %v886
    %1205 = vmatpush1.msra.mxu0 %v885
    %1206 = vmatprep.subr.mxu0 %v890
    %1207 = vmatpush1.msra.mxu0 %v889
    %1208 = vmatprep.subr.mxu0 %v894
    %1209 = vmatpush1.msra.mxu0 %v893
    %1210 = vmatprep.subr.mxu0 %v898
    %1211 = vmatpush1.msra.mxu0 %v897
    %1212 = vmatprep.subr.mxu0 %v902
    %1213 = vmatpush1.msra.mxu0 %v901
    %1214 = vmatprep.subr.mxu0 %v906
    %1215 = vmatpush1.msra.mxu0 %v905
    %1216 = vmatprep.subr.mxu0 %v910
    %1217 = vmatpush1.msra.mxu0 %v909
    %1218 = vmatprep.subr.mxu0 %v914
    %1219 = vmatpush1.msra.mxu0 %v913
    %1220 = vmatprep.subr.mxu0 %v918
    %1221 = vmatpush1.msra.mxu0 %v917
    %1222 = vmatprep.subr.mxu0 %v922
    %1223 = vmatpush1.msra.mxu0 %v921
    %1224 = vmatprep.subr.mxu0 %v926
    %1225 = vmatpush1.msra.mxu0 %v925
    %1226 = vmatprep.mubr.f32.mxu0 %v670
    %1227 = vmatmul.mubr.f32.gmra.mrb[0].mxu0 %v669
    %v1228 = vpop.f32.mrb[0].mxu0
    %v1229 = vadd.f32 %v1158, %v1228
    %v1230 = vpop.f32.mrb[0].mxu0
    %v1231 = vadd.f32 %v1160, %v1230
    %1232 = vdwg.mxu0
    %v1233 = vadd.f32 %v1087, %v101
    %v1234 = vadd.f32 %v1089, %v102
    %v1235 = vadd.f32 %v1229, %v103
    %v1236 = vadd.f32 %v1231, %v104
    %v1237 = vmax.f32 %v1233, 0.0
    %v1238 = vmax.f32 %v1234, 0.0
    %v1239 = vmax.f32 %v1235, 0.0
    %v1240 = vmax.f32 %v1236, 0.0
    %v1241 = vld [vmem:[#allocation7] sm:$0xff]
    %v1242 = vld [vmem:[#allocation7 + $0x8] sm:$0xff]
    %v1243 = vld [vmem:[#allocation7 + $0x10] sm:$0xff]
    %v1244 = vld [vmem:[#allocation7 + $0x18] sm:$0xff]
    %v1245 = vld [vmem:[#allocation7 + $0x20] sm:$0xff]
    %v1246 = vld [vmem:[#allocation7 + $0x28] sm:$0xff]
    %v1247 = vld [vmem:[#allocation7 + $0x30] sm:$0xff]
    %v1248 = vld [vmem:[#allocation7 + $0x38] sm:$0xff]
    %v1249 = vld [vmem:[#allocation7 + $0x40] sm:$0xff]
    %v1250 = vld [vmem:[#allocation7 + $0x48] sm:$0xff]
    %v1251 = vld [vmem:[#allocation7 + $0x50] sm:$0xff]
    %v1252 = vld [vmem:[#allocation7 + $0x58] sm:$0xff]
    %v1253 = vld [vmem:[#allocation7 + $0x60] sm:$0xff]
    %v1254 = vld [vmem:[#allocation7 + $0x68] sm:$0xff]
    %v1255 = vld [vmem:[#allocation7 + $0x70] sm:$0xff]
    %v1256 = vld [vmem:[#allocation7 + $0x78] sm:$0xff]
    %v1257 = vld [vmem:[#allocation7 + $0x80] sm:$0xff]
    %v1258 = vld [vmem:[#allocation7 + $0x88] sm:$0xff]
    %v1259 = vld [vmem:[#allocation7 + $0x90] sm:$0xff]
    %v1260 = vld [vmem:[#allocation7 + $0x98] sm:$0xff]
    %v1261 = vld [vmem:[#allocation7 + $0xa0] sm:$0xff]
    %v1262 = vld [vmem:[#allocation7 + $0xa8] sm:$0xff]
    %v1263 = vld [vmem:[#allocation7 + $0xb0] sm:$0xff]
    %v1264 = vld [vmem:[#allocation7 + $0xb8] sm:$0xff]
    %v1265 = vld [vmem:[#allocation7 + $0xc0] sm:$0xff]
    %v1266 = vld [vmem:[#allocation7 + $0xc8] sm:$0xff]
    %v1267 = vld [vmem:[#allocation7 + $0xd0] sm:$0xff]
    %v1268 = vld [vmem:[#allocation7 + $0xd8] sm:$0xff]
    %v1269 = vld [vmem:[#allocation7 + $0xe0] sm:$0xff]
    %v1270 = vld [vmem:[#allocation7 + $0xe8] sm:$0xff]
    %v1271 = vld [vmem:[#allocation7 + $0xf0] sm:$0xff]
    %v1272 = vld [vmem:[#allocation7 + $0xf8] sm:$0xff]
    %v1273 = vld [vmem:[#allocation7 + $0x100] sm:$0xff]
    %v1274 = vld [vmem:[#allocation7 + $0x108] sm:$0xff]
    %v1275 = vld [vmem:[#allocation7 + $0x110] sm:$0xff]
    %v1276 = vld [vmem:[#allocation7 + $0x118] sm:$0xff]
    %v1277 = vld [vmem:[#allocation7 + $0x120] sm:$0xff]
    %v1278 = vld [vmem:[#allocation7 + $0x128] sm:$0xff]
    %v1279 = vld [vmem:[#allocation7 + $0x130] sm:$0xff]
    %v1280 = vld [vmem:[#allocation7 + $0x138] sm:$0xff]
    %v1281 = vld [vmem:[#allocation7 + $0x140] sm:$0xff]
    %v1282 = vld [vmem:[#allocation7 + $0x148] sm:$0xff]
    %v1283 = vld [vmem:[#allocation7 + $0x150] sm:$0xff]
    %v1284 = vld [vmem:[#allocation7 + $0x158] sm:$0xff]
    %v1285 = vld [vmem:[#allocation7 + $0x160] sm:$0xff]
    %v1286 = vld [vmem:[#allocation7 + $0x168] sm:$0xff]
    %v1287 = vld [vmem:[#allocation7 + $0x170] sm:$0xff]
    %v1288 = vld [vmem:[#allocation7 + $0x178] sm:$0xff]
    %v1289 = vld [vmem:[#allocation7 + $0x180] sm:$0xff]
    %v1290 = vld [vmem:[#allocation7 + $0x188] sm:$0xff]
    %v1291 = vld [vmem:[#allocation7 + $0x190] sm:$0xff]
    %v1292 = vld [vmem:[#allocation7 + $0x198] sm:$0xff]
    %v1293 = vld [vmem:[#allocation7 + $0x1a0] sm:$0xff]
    %v1294 = vld [vmem:[#allocation7 + $0x1a8] sm:$0xff]
    %v1295 = vld [vmem:[#allocation7 + $0x1b0] sm:$0xff]
    %v1296 = vld [vmem:[#allocation7 + $0x1b8] sm:$0xff]
    %v1297 = vld [vmem:[#allocation7 + $0x1c0] sm:$0xff]
    %v1298 = vld [vmem:[#allocation7 + $0x1c8] sm:$0xff]
    %v1299 = vld [vmem:[#allocation7 + $0x1d0] sm:$0xff]
    %v1300 = vld [vmem:[#allocation7 + $0x1d8] sm:$0xff]
    %v1301 = vld [vmem:[#allocation7 + $0x1e0] sm:$0xff]
    %v1302 = vld [vmem:[#allocation7 + $0x1e8] sm:$0xff]
    %v1303 = vld [vmem:[#allocation7 + $0x1f0] sm:$0xff]
    %v1304 = vld [vmem:[#allocation7 + $0x1f8] sm:$0xff]
    %v1305 = vld [vmem:[#allocation7 + $0x200] sm:$0xff]
    %v1306 = vld [vmem:[#allocation7 + $0x208] sm:$0xff]
    %v1307 = vld [vmem:[#allocation7 + $0x210] sm:$0xff]
    %v1308 = vld [vmem:[#allocation7 + $0x218] sm:$0xff]
    %v1309 = vld [vmem:[#allocation7 + $0x220] sm:$0xff]
    %v1310 = vld [vmem:[#allocation7 + $0x228] sm:$0xff]
    %v1311 = vld [vmem:[#allocation7 + $0x230] sm:$0xff]
    %v1312 = vld [vmem:[#allocation7 + $0x238] sm:$0xff]
    %v1313 = vld [vmem:[#allocation7 + $0x240] sm:$0xff]
    %v1314 = vld [vmem:[#allocation7 + $0x248] sm:$0xff]
    %v1315 = vld [vmem:[#allocation7 + $0x250] sm:$0xff]
    %v1316 = vld [vmem:[#allocation7 + $0x258] sm:$0xff]
    %v1317 = vld [vmem:[#allocation7 + $0x260] sm:$0xff]
    %v1318 = vld [vmem:[#allocation7 + $0x268] sm:$0xff]
    %v1319 = vld [vmem:[#allocation7 + $0x270] sm:$0xff]
    %v1320 = vld [vmem:[#allocation7 + $0x278] sm:$0xff]
    %v1321 = vld [vmem:[#allocation7 + $0x280] sm:$0xff]
    %v1322 = vld [vmem:[#allocation7 + $0x288] sm:$0xff]
    %v1323 = vld [vmem:[#allocation7 + $0x290] sm:$0xff]
    %v1324 = vld [vmem:[#allocation7 + $0x298] sm:$0xff]
    %v1325 = vld [vmem:[#allocation7 + $0x2a0] sm:$0xff]
    %v1326 = vld [vmem:[#allocation7 + $0x2a8] sm:$0xff]
    %v1327 = vld [vmem:[#allocation7 + $0x2b0] sm:$0xff]
    %v1328 = vld [vmem:[#allocation7 + $0x2b8] sm:$0xff]
    %v1329 = vld [vmem:[#allocation7 + $0x2c0] sm:$0xff]
    %v1330 = vld [vmem:[#allocation7 + $0x2c8] sm:$0xff]
    %v1331 = vld [vmem:[#allocation7 + $0x2d0] sm:$0xff]
    %v1332 = vld [vmem:[#allocation7 + $0x2d8] sm:$0xff]
    %v1333 = vld [vmem:[#allocation7 + $0x2e0] sm:$0xff]
    %v1334 = vld [vmem:[#allocation7 + $0x2e8] sm:$0xff]
    %v1335 = vld [vmem:[#allocation7 + $0x2f0] sm:$0xff]
    %v1336 = vld [vmem:[#allocation7 + $0x2f8] sm:$0xff]
    %v1337 = vld [vmem:[#allocation7 + $0x300] sm:$0xff]
    %v1338 = vld [vmem:[#allocation7 + $0x308] sm:$0xff]
    %v1339 = vld [vmem:[#allocation7 + $0x310] sm:$0xff]
    %v1340 = vld [vmem:[#allocation7 + $0x318] sm:$0xff]
    %v1341 = vld [vmem:[#allocation7 + $0x320] sm:$0xff]
    %v1342 = vld [vmem:[#allocation7 + $0x328] sm:$0xff]
    %v1343 = vld [vmem:[#allocation7 + $0x330] sm:$0xff]
    %v1344 = vld [vmem:[#allocation7 + $0x338] sm:$0xff]
    %v1345 = vld [vmem:[#allocation7 + $0x340] sm:$0xff]
    %v1346 = vld [vmem:[#allocation7 + $0x348] sm:$0xff]
    %v1347 = vld [vmem:[#allocation7 + $0x350] sm:$0xff]
    %v1348 = vld [vmem:[#allocation7 + $0x358] sm:$0xff]
    %v1349 = vld [vmem:[#allocation7 + $0x360] sm:$0xff]
    %v1350 = vld [vmem:[#allocation7 + $0x368] sm:$0xff]
    %v1351 = vld [vmem:[#allocation7 + $0x370] sm:$0xff]
    %v1352 = vld [vmem:[#allocation7 + $0x378] sm:$0xff]
    %v1353 = vld [vmem:[#allocation7 + $0x380] sm:$0xff]
    %v1354 = vld [vmem:[#allocation7 + $0x388] sm:$0xff]
    %v1355 = vld [vmem:[#allocation7 + $0x390] sm:$0xff]
    %v1356 = vld [vmem:[#allocation7 + $0x398] sm:$0xff]
    %v1357 = vld [vmem:[#allocation7 + $0x3a0] sm:$0xff]
    %v1358 = vld [vmem:[#allocation7 + $0x3a8] sm:$0xff]
    %v1359 = vld [vmem:[#allocation7 + $0x3b0] sm:$0xff]
    %v1360 = vld [vmem:[#allocation7 + $0x3b8] sm:$0xff]
    %v1361 = vld [vmem:[#allocation7 + $0x3c0] sm:$0xff]
    %v1362 = vld [vmem:[#allocation7 + $0x3c8] sm:$0xff]
    %v1363 = vld [vmem:[#allocation7 + $0x3d0] sm:$0xff]
    %v1364 = vld [vmem:[#allocation7 + $0x3d8] sm:$0xff]
    %v1365 = vld [vmem:[#allocation7 + $0x3e0] sm:$0xff]
    %v1366 = vld [vmem:[#allocation7 + $0x3e8] sm:$0xff]
    %v1367 = vld [vmem:[#allocation7 + $0x3f0] sm:$0xff]
    %v1368 = vld [vmem:[#allocation7 + $0x3f8] sm:$0xff]
    %v1369 = vld [vmem:[#allocation7 + $0x400] sm:$0xff]
    %v1370 = vld [vmem:[#allocation7 + $0x408] sm:$0xff]
    %v1371 = vld [vmem:[#allocation7 + $0x410] sm:$0xff]
    %v1372 = vld [vmem:[#allocation7 + $0x418] sm:$0xff]
    %v1373 = vld [vmem:[#allocation7 + $0x420] sm:$0xff]
    %v1374 = vld [vmem:[#allocation7 + $0x428] sm:$0xff]
    %v1375 = vld [vmem:[#allocation7 + $0x430] sm:$0xff]
    %v1376 = vld [vmem:[#allocation7 + $0x438] sm:$0xff]
    %v1377 = vld [vmem:[#allocation7 + $0x440] sm:$0xff]
    %v1378 = vld [vmem:[#allocation7 + $0x448] sm:$0xff]
    %v1379 = vld [vmem:[#allocation7 + $0x450] sm:$0xff]
    %v1380 = vld [vmem:[#allocation7 + $0x458] sm:$0xff]
    %v1381 = vld [vmem:[#allocation7 + $0x460] sm:$0xff]
    %v1382 = vld [vmem:[#allocation7 + $0x468] sm:$0xff]
    %v1383 = vld [vmem:[#allocation7 + $0x470] sm:$0xff]
    %v1384 = vld [vmem:[#allocation7 + $0x478] sm:$0xff]
    %v1385 = vld [vmem:[#allocation7 + $0x480] sm:$0xff]
    %v1386 = vld [vmem:[#allocation7 + $0x488] sm:$0xff]
    %v1387 = vld [vmem:[#allocation7 + $0x490] sm:$0xff]
    %v1388 = vld [vmem:[#allocation7 + $0x498] sm:$0xff]
    %v1389 = vld [vmem:[#allocation7 + $0x4a0] sm:$0xff]
    %v1390 = vld [vmem:[#allocation7 + $0x4a8] sm:$0xff]
    %v1391 = vld [vmem:[#allocation7 + $0x4b0] sm:$0xff]
    %v1392 = vld [vmem:[#allocation7 + $0x4b8] sm:$0xff]
    %v1393 = vld [vmem:[#allocation7 + $0x4c0] sm:$0xff]
    %v1394 = vld [vmem:[#allocation7 + $0x4c8] sm:$0xff]
    %v1395 = vld [vmem:[#allocation7 + $0x4d0] sm:$0xff]
    %v1396 = vld [vmem:[#allocation7 + $0x4d8] sm:$0xff]
    %v1397 = vld [vmem:[#allocation7 + $0x4e0] sm:$0xff]
    %v1398 = vld [vmem:[#allocation7 + $0x4e8] sm:$0xff]
    %v1399 = vld [vmem:[#allocation7 + $0x4f0] sm:$0xff]
    %v1400 = vld [vmem:[#allocation7 + $0x4f8] sm:$0xff]
    %v1401 = vld [vmem:[#allocation7 + $0x500] sm:$0xff]
    %v1402 = vld [vmem:[#allocation7 + $0x508] sm:$0xff]
    %v1403 = vld [vmem:[#allocation7 + $0x510] sm:$0xff]
    %v1404 = vld [vmem:[#allocation7 + $0x518] sm:$0xff]
    %v1405 = vld [vmem:[#allocation7 + $0x520] sm:$0xff]
    %v1406 = vld [vmem:[#allocation7 + $0x528] sm:$0xff]
    %v1407 = vld [vmem:[#allocation7 + $0x530] sm:$0xff]
    %v1408 = vld [vmem:[#allocation7 + $0x538] sm:$0xff]
    %v1409 = vld [vmem:[#allocation7 + $0x540] sm:$0xff]
    %v1410 = vld [vmem:[#allocation7 + $0x548] sm:$0xff]
    %v1411 = vld [vmem:[#allocation7 + $0x550] sm:$0xff]
    %v1412 = vld [vmem:[#allocation7 + $0x558] sm:$0xff]
    %v1413 = vld [vmem:[#allocation7 + $0x560] sm:$0xff]
    %v1414 = vld [vmem:[#allocation7 + $0x568] sm:$0xff]
    %v1415 = vld [vmem:[#allocation7 + $0x570] sm:$0xff]
    %v1416 = vld [vmem:[#allocation7 + $0x578] sm:$0xff]
    %v1417 = vld [vmem:[#allocation7 + $0x580] sm:$0xff]
    %v1418 = vld [vmem:[#allocation7 + $0x588] sm:$0xff]
    %v1419 = vld [vmem:[#allocation7 + $0x590] sm:$0xff]
    %v1420 = vld [vmem:[#allocation7 + $0x598] sm:$0xff]
    %v1421 = vld [vmem:[#allocation7 + $0x5a0] sm:$0xff]
    %v1422 = vld [vmem:[#allocation7 + $0x5a8] sm:$0xff]
    %v1423 = vld [vmem:[#allocation7 + $0x5b0] sm:$0xff]
    %v1424 = vld [vmem:[#allocation7 + $0x5b8] sm:$0xff]
    %v1425 = vld [vmem:[#allocation7 + $0x5c0] sm:$0xff]
    %v1426 = vld [vmem:[#allocation7 + $0x5c8] sm:$0xff]
    %v1427 = vld [vmem:[#allocation7 + $0x5d0] sm:$0xff]
    %v1428 = vld [vmem:[#allocation7 + $0x5d8] sm:$0xff]
    %v1429 = vld [vmem:[#allocation7 + $0x5e0] sm:$0xff]
    %v1430 = vld [vmem:[#allocation7 + $0x5e8] sm:$0xff]
    %v1431 = vld [vmem:[#allocation7 + $0x5f0] sm:$0xff]
    %v1432 = vld [vmem:[#allocation7 + $0x5f8] sm:$0xff]
    %v1433 = vld [vmem:[#allocation7 + $0x600] sm:$0xff]
    %v1434 = vld [vmem:[#allocation7 + $0x608] sm:$0xff]
    %v1435 = vld [vmem:[#allocation7 + $0x610] sm:$0xff]
    %v1436 = vld [vmem:[#allocation7 + $0x618] sm:$0xff]
    %v1437 = vld [vmem:[#allocation7 + $0x620] sm:$0xff]
    %v1438 = vld [vmem:[#allocation7 + $0x628] sm:$0xff]
    %v1439 = vld [vmem:[#allocation7 + $0x630] sm:$0xff]
    %v1440 = vld [vmem:[#allocation7 + $0x638] sm:$0xff]
    %v1441 = vld [vmem:[#allocation7 + $0x640] sm:$0xff]
    %v1442 = vld [vmem:[#allocation7 + $0x648] sm:$0xff]
    %v1443 = vld [vmem:[#allocation7 + $0x650] sm:$0xff]
    %v1444 = vld [vmem:[#allocation7 + $0x658] sm:$0xff]
    %v1445 = vld [vmem:[#allocation7 + $0x660] sm:$0xff]
    %v1446 = vld [vmem:[#allocation7 + $0x668] sm:$0xff]
    %v1447 = vld [vmem:[#allocation7 + $0x670] sm:$0xff]
    %v1448 = vld [vmem:[#allocation7 + $0x678] sm:$0xff]
    %v1449 = vld [vmem:[#allocation7 + $0x680] sm:$0xff]
    %v1450 = vld [vmem:[#allocation7 + $0x688] sm:$0xff]
    %v1451 = vld [vmem:[#allocation7 + $0x690] sm:$0xff]
    %v1452 = vld [vmem:[#allocation7 + $0x698] sm:$0xff]
    %v1453 = vld [vmem:[#allocation7 + $0x6a0] sm:$0xff]
    %v1454 = vld [vmem:[#allocation7 + $0x6a8] sm:$0xff]
    %v1455 = vld [vmem:[#allocation7 + $0x6b0] sm:$0xff]
    %v1456 = vld [vmem:[#allocation7 + $0x6b8] sm:$0xff]
    %v1457 = vld [vmem:[#allocation7 + $0x6c0] sm:$0xff]
    %v1458 = vld [vmem:[#allocation7 + $0x6c8] sm:$0xff]
    %v1459 = vld [vmem:[#allocation7 + $0x6d0] sm:$0xff]
    %v1460 = vld [vmem:[#allocation7 + $0x6d8] sm:$0xff]
    %v1461 = vld [vmem:[#allocation7 + $0x6e0] sm:$0xff]
    %v1462 = vld [vmem:[#allocation7 + $0x6e8] sm:$0xff]
    %v1463 = vld [vmem:[#allocation7 + $0x6f0] sm:$0xff]
    %v1464 = vld [vmem:[#allocation7 + $0x6f8] sm:$0xff]
    %v1465 = vld [vmem:[#allocation7 + $0x700] sm:$0xff]
    %v1466 = vld [vmem:[#allocation7 + $0x708] sm:$0xff]
    %v1467 = vld [vmem:[#allocation7 + $0x710] sm:$0xff]
    %v1468 = vld [vmem:[#allocation7 + $0x718] sm:$0xff]
    %v1469 = vld [vmem:[#allocation7 + $0x720] sm:$0xff]
    %v1470 = vld [vmem:[#allocation7 + $0x728] sm:$0xff]
    %v1471 = vld [vmem:[#allocation7 + $0x730] sm:$0xff]
    %v1472 = vld [vmem:[#allocation7 + $0x738] sm:$0xff]
    %v1473 = vld [vmem:[#allocation7 + $0x740] sm:$0xff]
    %v1474 = vld [vmem:[#allocation7 + $0x748] sm:$0xff]
    %v1475 = vld [vmem:[#allocation7 + $0x750] sm:$0xff]
    %v1476 = vld [vmem:[#allocation7 + $0x758] sm:$0xff]
    %v1477 = vld [vmem:[#allocation7 + $0x760] sm:$0xff]
    %v1478 = vld [vmem:[#allocation7 + $0x768] sm:$0xff]
    %v1479 = vld [vmem:[#allocation7 + $0x770] sm:$0xff]
    %v1480 = vld [vmem:[#allocation7 + $0x778] sm:$0xff]
    %v1481 = vld [vmem:[#allocation7 + $0x780] sm:$0xff]
    %v1482 = vld [vmem:[#allocation7 + $0x788] sm:$0xff]
    %v1483 = vld [vmem:[#allocation7 + $0x790] sm:$0xff]
    %v1484 = vld [vmem:[#allocation7 + $0x798] sm:$0xff]
    %v1485 = vld [vmem:[#allocation7 + $0x7a0] sm:$0xff]
    %v1486 = vld [vmem:[#allocation7 + $0x7a8] sm:$0xff]
    %v1487 = vld [vmem:[#allocation7 + $0x7b0] sm:$0xff]
    %v1488 = vld [vmem:[#allocation7 + $0x7b8] sm:$0xff]
    %v1489 = vld [vmem:[#allocation7 + $0x7c0] sm:$0xff]
    %v1490 = vld [vmem:[#allocation7 + $0x7c8] sm:$0xff]
    %v1491 = vld [vmem:[#allocation7 + $0x7d0] sm:$0xff]
    %v1492 = vld [vmem:[#allocation7 + $0x7d8] sm:$0xff]
    %v1493 = vld [vmem:[#allocation7 + $0x7e0] sm:$0xff]
    %v1494 = vld [vmem:[#allocation7 + $0x7e8] sm:$0xff]
    %v1495 = vld [vmem:[#allocation7 + $0x7f0] sm:$0xff]
    %v1496 = vld [vmem:[#allocation7 + $0x7f8] sm:$0xff]
    %v1497 = vld [vmem:[%s6] sm:$0xf]
    %v1499 = vlaneseq
    %v1500 = vshrl.u32 %v1499, 7
    %v1501 = vsub.s32 0, %v1500
    %v1502 = vrot.slane %v1497, %v1501
    %v1503 = vlaneseq
    %v1504 = vshrl.u32 %v1503, 7
    %v1505 = vsub.s32 1, %v1504
    %v1506 = vrot.slane %v1497, %v1505
    %v1507 = vlaneseq
    %v1508 = vshrl.u32 %v1507, 7
    %v1509 = vsub.s32 2, %v1508
    %v1510 = vrot.slane %v1497, %v1509
    %v1511 = vlaneseq
    %v1512 = vshrl.u32 %v1511, 7
    %v1513 = vsub.s32 3, %v1512
    %v1514 = vrot.slane %v1497, %v1513
    %1519 = vmatprep.subr.mxu0 %v1242
    %1520 = vmatpush1.msra.mxu0 %v1241
    %1521 = vmatprep.subr.mxu0 %v1246
    %1522 = vmatpush1.msra.mxu0 %v1245
    %1523 = vmatprep.subr.mxu0 %v1250
    %1524 = vmatpush1.msra.mxu0 %v1249
    %1525 = vmatprep.subr.mxu0 %v1254
    %1526 = vmatpush1.msra.mxu0 %v1253
    %1527 = vmatprep.subr.mxu0 %v1258
    %1528 = vmatpush1.msra.mxu0 %v1257
    %1529 = vmatprep.subr.mxu0 %v1262
    %1530 = vmatpush1.msra.mxu0 %v1261
    %1531 = vmatprep.subr.mxu0 %v1266
    %1532 = vmatpush1.msra.mxu0 %v1265
    %1533 = vmatprep.subr.mxu0 %v1270
    %1534 = vmatpush1.msra.mxu0 %v1269
    %1535 = vmatprep.subr.mxu0 %v1274
    %1536 = vmatpush1.msra.mxu0 %v1273
    %1537 = vmatprep.subr.mxu0 %v1278
    %1538 = vmatpush1.msra.mxu0 %v1277
    %1539 = vmatprep.subr.mxu0 %v1282
    %1540 = vmatpush1.msra.mxu0 %v1281
    %1541 = vmatprep.subr.mxu0 %v1286
    %1542 = vmatpush1.msra.mxu0 %v1285
    %1543 = vmatprep.subr.mxu0 %v1290
    %1544 = vmatpush1.msra.mxu0 %v1289
    %1545 = vmatprep.subr.mxu0 %v1294
    %1546 = vmatpush1.msra.mxu0 %v1293
    %1547 = vmatprep.subr.mxu0 %v1298
    %1548 = vmatpush1.msra.mxu0 %v1297
    %1549 = vmatprep.subr.mxu0 %v1302
    %1550 = vmatpush1.msra.mxu0 %v1301
    %1551 = vmatprep.subr.mxu0 %v1306
    %1552 = vmatpush1.msra.mxu0 %v1305
    %1553 = vmatprep.subr.mxu0 %v1310
    %1554 = vmatpush1.msra.mxu0 %v1309
    %1555 = vmatprep.subr.mxu0 %v1314
    %1556 = vmatpush1.msra.mxu0 %v1313
    %1557 = vmatprep.subr.mxu0 %v1318
    %1558 = vmatpush1.msra.mxu0 %v1317
    %1559 = vmatprep.subr.mxu0 %v1322
    %1560 = vmatpush1.msra.mxu0 %v1321
    %1561 = vmatprep.subr.mxu0 %v1326
    %1562 = vmatpush1.msra.mxu0 %v1325
    %1563 = vmatprep.subr.mxu0 %v1330
    %1564 = vmatpush1.msra.mxu0 %v1329
    %1565 = vmatprep.subr.mxu0 %v1334
    %1566 = vmatpush1.msra.mxu0 %v1333
    %1567 = vmatprep.subr.mxu0 %v1338
    %1568 = vmatpush1.msra.mxu0 %v1337
    %1569 = vmatprep.subr.mxu0 %v1342
    %1570 = vmatpush1.msra.mxu0 %v1341
    %1571 = vmatprep.subr.mxu0 %v1346
    %1572 = vmatpush1.msra.mxu0 %v1345
    %1573 = vmatprep.subr.mxu0 %v1350
    %1574 = vmatpush1.msra.mxu0 %v1349
    %1575 = vmatprep.subr.mxu0 %v1354
    %1576 = vmatpush1.msra.mxu0 %v1353
    %1577 = vmatprep.subr.mxu0 %v1358
    %1578 = vmatpush1.msra.mxu0 %v1357
    %1579 = vmatprep.subr.mxu0 %v1362
    %1580 = vmatpush1.msra.mxu0 %v1361
    %1581 = vmatprep.subr.mxu0 %v1366
    %1582 = vmatpush1.msra.mxu0 %v1365
    %1583 = vmatprep.mubr.f32.mxu0 %v1238
    %1584 = vmatmul.mubr.f32.gmra.mrb[0].mxu0 %v1237
    %v1585 = vpop.f32.mrb[0].mxu0
    %v1586 = vadd.f32 %v1502, %v1585
    %v1587 = vpop.f32.mrb[0].mxu0
    %v1588 = vadd.f32 %v1506, %v1587
    %1589 = vdwg.mxu0
    %1590 = vmatprep.subr.mxu0 %v1370
    %1591 = vmatpush1.msra.mxu0 %v1369
    %1592 = vmatprep.subr.mxu0 %v1374
    %1593 = vmatpush1.msra.mxu0 %v1373
    %1594 = vmatprep.subr.mxu0 %v1378
    %1595 = vmatpush1.msra.mxu0 %v1377
    %1596 = vmatprep.subr.mxu0 %v1382
    %1597 = vmatpush1.msra.mxu0 %v1381
    %1598 = vmatprep.subr.mxu0 %v1386
    %1599 = vmatpush1.msra.mxu0 %v1385
    %1600 = vmatprep.subr.mxu0 %v1390
    %1601 = vmatpush1.msra.mxu0 %v1389
    %1602 = vmatprep.subr.mxu0 %v1394
    %1603 = vmatpush1.msra.mxu0 %v1393
    %1604 = vmatprep.subr.mxu0 %v1398
    %1605 = vmatpush1.msra.mxu0 %v1397
    %1606 = vmatprep.subr.mxu0 %v1402
    %1607 = vmatpush1.msra.mxu0 %v1401
    %1608 = vmatprep.subr.mxu0 %v1406
    %1609 = vmatpush1.msra.mxu0 %v1405
    %1610 = vmatprep.subr.mxu0 %v1410
    %1611 = vmatpush1.msra.mxu0 %v1409
    %1612 = vmatprep.subr.mxu0 %v1414
    %1613 = vmatpush1.msra.mxu0 %v1413
    %1614 = vmatprep.subr.mxu0 %v1418
    %1615 = vmatpush1.msra.mxu0 %v1417
    %1616 = vmatprep.subr.mxu0 %v1422
    %1617 = vmatpush1.msra.mxu0 %v1421
    %1618 = vmatprep.subr.mxu0 %v1426
    %1619 = vmatpush1.msra.mxu0 %v1425
    %1620 = vmatprep.subr.mxu0 %v1430
    %1621 = vmatpush1.msra.mxu0 %v1429
    %1622 = vmatprep.subr.mxu0 %v1434
    %1623 = vmatpush1.msra.mxu0 %v1433
    %1624 = vmatprep.subr.mxu0 %v1438
    %1625 = vmatpush1.msra.mxu0 %v1437
    %1626 = vmatprep.subr.mxu0 %v1442
    %1627 = vmatpush1.msra.mxu0 %v1441
    %1628 = vmatprep.subr.mxu0 %v1446
    %1629 = vmatpush1.msra.mxu0 %v1445
    %1630 = vmatprep.subr.mxu0 %v1450
    %1631 = vmatpush1.msra.mxu0 %v1449
    %1632 = vmatprep.subr.mxu0 %v1454
    %1633 = vmatpush1.msra.mxu0 %v1453
    %1634 = vmatprep.subr.mxu0 %v1458
    %1635 = vmatpush1.msra.mxu0 %v1457
    %1636 = vmatprep.subr.mxu0 %v1462
    %1637 = vmatpush1.msra.mxu0 %v1461
    %1638 = vmatprep.subr.mxu0 %v1466
    %1639 = vmatpush1.msra.mxu0 %v1465
    %1640 = vmatprep.subr.mxu0 %v1470
    %1641 = vmatpush1.msra.mxu0 %v1469
    %1642 = vmatprep.subr.mxu0 %v1474
    %1643 = vmatpush1.msra.mxu0 %v1473
    %1644 = vmatprep.subr.mxu0 %v1478
    %1645 = vmatpush1.msra.mxu0 %v1477
    %1646 = vmatprep.subr.mxu0 %v1482
    %1647 = vmatpush1.msra.mxu0 %v1481
    %1648 = vmatprep.subr.mxu0 %v1486
    %1649 = vmatpush1.msra.mxu0 %v1485
    %1650 = vmatprep.subr.mxu0 %v1490
    %1651 = vmatpush1.msra.mxu0 %v1489
    %1652 = vmatprep.subr.mxu0 %v1494
    %1653 = vmatpush1.msra.mxu0 %v1493
    %1654 = vmatprep.mubr.f32.mxu0 %v1240
    %1655 = vmatmul.mubr.f32.gmra.mrb[0].mxu0 %v1239
    %v1656 = vpop.f32.mrb[0].mxu0
    %v1657 = vadd.f32 %v1586, %v1656
    %v1658 = vpop.f32.mrb[0].mxu0
    %v1659 = vadd.f32 %v1588, %v1658
    %1660 = vdwg.mxu0
    %1661 = vmatprep.subr.mxu0 %v1244
    %1662 = vmatpush1.msra.mxu0 %v1243
    %1663 = vmatprep.subr.mxu0 %v1248
    %1664 = vmatpush1.msra.mxu0 %v1247
    %1665 = vmatprep.subr.mxu0 %v1252
    %1666 = vmatpush1.msra.mxu0 %v1251
    %1667 = vmatprep.subr.mxu0 %v1256
    %1668 = vmatpush1.msra.mxu0 %v1255
    %1669 = vmatprep.subr.mxu0 %v1260
    %1670 = vmatpush1.msra.mxu0 %v1259
    %1671 = vmatprep.subr.mxu0 %v1264
    %1672 = vmatpush1.msra.mxu0 %v1263
    %1673 = vmatprep.subr.mxu0 %v1268
    %1674 = vmatpush1.msra.mxu0 %v1267
    %1675 = vmatprep.subr.mxu0 %v1272
    %1676 = vmatpush1.msra.mxu0 %v1271
    %1677 = vmatprep.subr.mxu0 %v1276
    %1678 = vmatpush1.msra.mxu0 %v1275
    %1679 = vmatprep.subr.mxu0 %v1280
    %1680 = vmatpush1.msra.mxu0 %v1279
    %1681 = vmatprep.subr.mxu0 %v1284
    %1682 = vmatpush1.msra.mxu0 %v1283
    %1683 = vmatprep.subr.mxu0 %v1288
    %1684 = vmatpush1.msra.mxu0 %v1287
    %1685 = vmatprep.subr.mxu0 %v1292
    %1686 = vmatpush1.msra.mxu0 %v1291
    %1687 = vmatprep.subr.mxu0 %v1296
    %1688 = vmatpush1.msra.mxu0 %v1295
    %1689 = vmatprep.subr.mxu0 %v1300
    %1690 = vmatpush1.msra.mxu0 %v1299
    %1691 = vmatprep.subr.mxu0 %v1304
    %1692 = vmatpush1.msra.mxu0 %v1303
    %1693 = vmatprep.subr.mxu0 %v1308
    %1694 = vmatpush1.msra.mxu0 %v1307
    %1695 = vmatprep.subr.mxu0 %v1312
    %1696 = vmatpush1.msra.mxu0 %v1311
    %1697 = vmatprep.subr.mxu0 %v1316
    %1698 = vmatpush1.msra.mxu0 %v1315
    %1699 = vmatprep.subr.mxu0 %v1320
    %1700 = vmatpush1.msra.mxu0 %v1319
    %1701 = vmatprep.subr.mxu0 %v1324
    %1702 = vmatpush1.msra.mxu0 %v1323
    %1703 = vmatprep.subr.mxu0 %v1328
    %1704 = vmatpush1.msra.mxu0 %v1327
    %1705 = vmatprep.subr.mxu0 %v1332
    %1706 = vmatpush1.msra.mxu0 %v1331
    %1707 = vmatprep.subr.mxu0 %v1336
    %1708 = vmatpush1.msra.mxu0 %v1335
    %1709 = vmatprep.subr.mxu0 %v1340
    %1710 = vmatpush1.msra.mxu0 %v1339
    %1711 = vmatprep.subr.mxu0 %v1344
    %1712 = vmatpush1.msra.mxu0 %v1343
    %1713 = vmatprep.subr.mxu0 %v1348
    %1714 = vmatpush1.msra.mxu0 %v1347
    %1715 = vmatprep.subr.mxu0 %v1352
    %1716 = vmatpush1.msra.mxu0 %v1351
    %1717 = vmatprep.subr.mxu0 %v1356
    %1718 = vmatpush1.msra.mxu0 %v1355
    %1719 = vmatprep.subr.mxu0 %v1360
    %1720 = vmatpush1.msra.mxu0 %v1359
    %1721 = vmatprep.subr.mxu0 %v1364
    %1722 = vmatpush1.msra.mxu0 %v1363
    %1723 = vmatprep.subr.mxu0 %v1368
    %1724 = vmatpush1.msra.mxu0 %v1367
    %1725 = vmatprep.mubr.f32.mxu0 %v1238
    %1726 = vmatmul.mubr.f32.gmra.mrb[0].mxu0 %v1237
    %v1727 = vpop.f32.mrb[0].mxu0
    %v1728 = vadd.f32 %v1510, %v1727
    %v1729 = vpop.f32.mrb[0].mxu0
    %v1730 = vadd.f32 %v1514, %v1729
    %1731 = vdwg.mxu0
    %1732 = vmatprep.subr.mxu0 %v1372
    %1733 = vmatpush1.msra.mxu0 %v1371
    %1734 = vmatprep.subr.mxu0 %v1376
    %1735 = vmatpush1.msra.mxu0 %v1375
    %1736 = vmatprep.subr.mxu0 %v1380
    %1737 = vmatpush1.msra.mxu0 %v1379
    %1738 = vmatprep.subr.mxu0 %v1384
    %1739 = vmatpush1.msra.mxu0 %v1383
    %1740 = vmatprep.subr.mxu0 %v1388
    %1741 = vmatpush1.msra.mxu0 %v1387
    %1742 = vmatprep.subr.mxu0 %v1392
    %1743 = vmatpush1.msra.mxu0 %v1391
    %1744 = vmatprep.subr.mxu0 %v1396
    %1745 = vmatpush1.msra.mxu0 %v1395
    %1746 = vmatprep.subr.mxu0 %v1400
    %1747 = vmatpush1.msra.mxu0 %v1399
    %1748 = vmatprep.subr.mxu0 %v1404
    %1749 = vmatpush1.msra.mxu0 %v1403
    %1750 = vmatprep.subr.mxu0 %v1408
    %1751 = vmatpush1.msra.mxu0 %v1407
    %1752 = vmatprep.subr.mxu0 %v1412
    %1753 = vmatpush1.msra.mxu0 %v1411
    %1754 = vmatprep.subr.mxu0 %v1416
    %1755 = vmatpush1.msra.mxu0 %v1415
    %1756 = vmatprep.subr.mxu0 %v1420
    %1757 = vmatpush1.msra.mxu0 %v1419
    %1758 = vmatprep.subr.mxu0 %v1424
    %1759 = vmatpush1.msra.mxu0 %v1423
    %1760 = vmatprep.subr.mxu0 %v1428
    %1761 = vmatpush1.msra.mxu0 %v1427
    %1762 = vmatprep.subr.mxu0 %v1432
    %1763 = vmatpush1.msra.mxu0 %v1431
    %1764 = vmatprep.subr.mxu0 %v1436
    %1765 = vmatpush1.msra.mxu0 %v1435
    %1766 = vmatprep.subr.mxu0 %v1440
    %1767 = vmatpush1.msra.mxu0 %v1439
    %1768 = vmatprep.subr.mxu0 %v1444
    %1769 = vmatpush1.msra.mxu0 %v1443
    %1770 = vmatprep.subr.mxu0 %v1448
    %1771 = vmatpush1.msra.mxu0 %v1447
    %1772 = vmatprep.subr.mxu0 %v1452
    %1773 = vmatpush1.msra.mxu0 %v1451
    %1774 = vmatprep.subr.mxu0 %v1456
    %1775 = vmatpush1.msra.mxu0 %v1455
    %1776 = vmatprep.subr.mxu0 %v1460
    %1777 = vmatpush1.msra.mxu0 %v1459
    %1778 = vmatprep.subr.mxu0 %v1464
    %1779 = vmatpush1.msra.mxu0 %v1463
    %1780 = vmatprep.subr.mxu0 %v1468
    %1781 = vmatpush1.msra.mxu0 %v1467
    %1782 = vmatprep.subr.mxu0 %v1472
    %1783 = vmatpush1.msra.mxu0 %v1471
    %1784 = vmatprep.subr.mxu0 %v1476
    %1785 = vmatpush1.msra.mxu0 %v1475
    %1786 = vmatprep.subr.mxu0 %v1480
    %1787 = vmatpush1.msra.mxu0 %v1479
    %1788 = vmatprep.subr.mxu0 %v1484
    %1789 = vmatpush1.msra.mxu0 %v1483
    %1790 = vmatprep.subr.mxu0 %v1488
    %1791 = vmatpush1.msra.mxu0 %v1487
    %1792 = vmatprep.subr.mxu0 %v1492
    %1793 = vmatpush1.msra.mxu0 %v1491
    %1794 = vmatprep.subr.mxu0 %v1496
    %1795 = vmatpush1.msra.mxu0 %v1495
    %1796 = vmatprep.mubr.f32.mxu0 %v1240
    %1797 = vmatmul.mubr.f32.gmra.mrb[0].mxu0 %v1239
    %v1798 = vpop.f32.mrb[0].mxu0
    %v1799 = vadd.f32 %v1728, %v1798
    %v1800 = vpop.f32.mrb[0].mxu0
    %v1801 = vadd.f32 %v1730, %v1800
    %1802 = vdwg.mxu0
    %v1803 = vmax.f32 %v1657, 0.0
    %v1804 = vmax.f32 %v1659, 0.0
    %v1805 = vmax.f32 %v1799, 0.0
    %v1806 = vmax.f32 %v1801, 0.0
    %v1807 = vld [vmem:[#allocation9] sm:$0xff]
    %v1808 = vld [vmem:[#allocation9 + $0x8] sm:$0xff]
    %v1809 = vld [vmem:[#allocation9 + $0x10] sm:$0xff]
    %v1810 = vld [vmem:[#allocation9 + $0x18] sm:$0xff]
    %v1811 = vld [vmem:[#allocation9 + $0x20] sm:$0xff]
    %v1812 = vld [vmem:[#allocation9 + $0x28] sm:$0xff]
    %v1813 = vld [vmem:[#allocation9 + $0x30] sm:$0xff]
    %v1814 = vld [vmem:[#allocation9 + $0x38] sm:$0xff]
    %v1815 = vld [vmem:[#allocation9 + $0x40] sm:$0xff]
    %v1816 = vld [vmem:[#allocation9 + $0x48] sm:$0xff]
    %v1817 = vld [vmem:[#allocation9 + $0x50] sm:$0xff]
    %v1818 = vld [vmem:[#allocation9 + $0x58] sm:$0xff]
    %v1819 = vld [vmem:[#allocation9 + $0x60] sm:$0xff]
    %v1820 = vld [vmem:[#allocation9 + $0x68] sm:$0xff]
    %v1821 = vld [vmem:[#allocation9 + $0x70] sm:$0xff]
    %v1822 = vld [vmem:[#allocation9 + $0x78] sm:$0xff]
    %v1823 = vld [vmem:[#allocation9 + $0x80] sm:$0xff]
    %v1824 = vld [vmem:[#allocation9 + $0x88] sm:$0xff]
    %v1825 = vld [vmem:[#allocation9 + $0x90] sm:$0xff]
    %v1826 = vld [vmem:[#allocation9 + $0x98] sm:$0xff]
    %v1827 = vld [vmem:[#allocation9 + $0xa0] sm:$0xff]
    %v1828 = vld [vmem:[#allocation9 + $0xa8] sm:$0xff]
    %v1829 = vld [vmem:[#allocation9 + $0xb0] sm:$0xff]
    %v1830 = vld [vmem:[#allocation9 + $0xb8] sm:$0xff]
    %v1831 = vld [vmem:[#allocation9 + $0xc0] sm:$0xff]
    %v1832 = vld [vmem:[#allocation9 + $0xc8] sm:$0xff]
    %v1833 = vld [vmem:[#allocation9 + $0xd0] sm:$0xff]
    %v1834 = vld [vmem:[#allocation9 + $0xd8] sm:$0xff]
    %v1835 = vld [vmem:[#allocation9 + $0xe0] sm:$0xff]
    %v1836 = vld [vmem:[#allocation9 + $0xe8] sm:$0xff]
    %v1837 = vld [vmem:[#allocation9 + $0xf0] sm:$0xff]
    %v1838 = vld [vmem:[#allocation9 + $0xf8] sm:$0xff]
    %v1839 = vld [vmem:[#allocation9 + $0x100] sm:$0xff]
    %v1840 = vld [vmem:[#allocation9 + $0x108] sm:$0xff]
    %v1841 = vld [vmem:[#allocation9 + $0x110] sm:$0xff]
    %v1842 = vld [vmem:[#allocation9 + $0x118] sm:$0xff]
    %v1843 = vld [vmem:[#allocation9 + $0x120] sm:$0xff]
    %v1844 = vld [vmem:[#allocation9 + $0x128] sm:$0xff]
    %v1845 = vld [vmem:[#allocation9 + $0x130] sm:$0xff]
    %v1846 = vld [vmem:[#allocation9 + $0x138] sm:$0xff]
    %v1847 = vld [vmem:[#allocation9 + $0x140] sm:$0xff]
    %v1848 = vld [vmem:[#allocation9 + $0x148] sm:$0xff]
    %v1849 = vld [vmem:[#allocation9 + $0x150] sm:$0xff]
    %v1850 = vld [vmem:[#allocation9 + $0x158] sm:$0xff]
    %v1851 = vld [vmem:[#allocation9 + $0x160] sm:$0xff]
    %v1852 = vld [vmem:[#allocation9 + $0x168] sm:$0xff]
    %v1853 = vld [vmem:[#allocation9 + $0x170] sm:$0xff]
    %v1854 = vld [vmem:[#allocation9 + $0x178] sm:$0xff]
    %v1855 = vld [vmem:[#allocation9 + $0x180] sm:$0xff]
    %v1856 = vld [vmem:[#allocation9 + $0x188] sm:$0xff]
    %v1857 = vld [vmem:[#allocation9 + $0x190] sm:$0xff]
    %v1858 = vld [vmem:[#allocation9 + $0x198] sm:$0xff]
    %v1859 = vld [vmem:[#allocation9 + $0x1a0] sm:$0xff]
    %v1860 = vld [vmem:[#allocation9 + $0x1a8] sm:$0xff]
    %v1861 = vld [vmem:[#allocation9 + $0x1b0] sm:$0xff]
    %v1862 = vld [vmem:[#allocation9 + $0x1b8] sm:$0xff]
    %v1863 = vld [vmem:[#allocation9 + $0x1c0] sm:$0xff]
    %v1864 = vld [vmem:[#allocation9 + $0x1c8] sm:$0xff]
    %v1865 = vld [vmem:[#allocation9 + $0x1d0] sm:$0xff]
    %v1866 = vld [vmem:[#allocation9 + $0x1d8] sm:$0xff]
    %v1867 = vld [vmem:[#allocation9 + $0x1e0] sm:$0xff]
    %v1868 = vld [vmem:[#allocation9 + $0x1e8] sm:$0xff]
    %v1869 = vld [vmem:[#allocation9 + $0x1f0] sm:$0xff]
    %v1870 = vld [vmem:[#allocation9 + $0x1f8] sm:$0xff]
    %v1871 = vld [vmem:[#allocation9 + $0x200] sm:$0xff]
    %v1872 = vld [vmem:[#allocation9 + $0x208] sm:$0xff]
    %v1873 = vld [vmem:[#allocation9 + $0x210] sm:$0xff]
    %v1874 = vld [vmem:[#allocation9 + $0x218] sm:$0xff]
    %v1875 = vld [vmem:[#allocation9 + $0x220] sm:$0xff]
    %v1876 = vld [vmem:[#allocation9 + $0x228] sm:$0xff]
    %v1877 = vld [vmem:[#allocation9 + $0x230] sm:$0xff]
    %v1878 = vld [vmem:[#allocation9 + $0x238] sm:$0xff]
    %v1879 = vld [vmem:[#allocation9 + $0x240] sm:$0xff]
    %v1880 = vld [vmem:[#allocation9 + $0x248] sm:$0xff]
    %v1881 = vld [vmem:[#allocation9 + $0x250] sm:$0xff]
    %v1882 = vld [vmem:[#allocation9 + $0x258] sm:$0xff]
    %v1883 = vld [vmem:[#allocation9 + $0x260] sm:$0xff]
    %v1884 = vld [vmem:[#allocation9 + $0x268] sm:$0xff]
    %v1885 = vld [vmem:[#allocation9 + $0x270] sm:$0xff]
    %v1886 = vld [vmem:[#allocation9 + $0x278] sm:$0xff]
    %v1887 = vld [vmem:[#allocation9 + $0x280] sm:$0xff]
    %v1888 = vld [vmem:[#allocation9 + $0x288] sm:$0xff]
    %v1889 = vld [vmem:[#allocation9 + $0x290] sm:$0xff]
    %v1890 = vld [vmem:[#allocation9 + $0x298] sm:$0xff]
    %v1891 = vld [vmem:[#allocation9 + $0x2a0] sm:$0xff]
    %v1892 = vld [vmem:[#allocation9 + $0x2a8] sm:$0xff]
    %v1893 = vld [vmem:[#allocation9 + $0x2b0] sm:$0xff]
    %v1894 = vld [vmem:[#allocation9 + $0x2b8] sm:$0xff]
    %v1895 = vld [vmem:[#allocation9 + $0x2c0] sm:$0xff]
    %v1896 = vld [vmem:[#allocation9 + $0x2c8] sm:$0xff]
    %v1897 = vld [vmem:[#allocation9 + $0x2d0] sm:$0xff]
    %v1898 = vld [vmem:[#allocation9 + $0x2d8] sm:$0xff]
    %v1899 = vld [vmem:[#allocation9 + $0x2e0] sm:$0xff]
    %v1900 = vld [vmem:[#allocation9 + $0x2e8] sm:$0xff]
    %v1901 = vld [vmem:[#allocation9 + $0x2f0] sm:$0xff]
    %v1902 = vld [vmem:[#allocation9 + $0x2f8] sm:$0xff]
    %v1903 = vld [vmem:[#allocation9 + $0x300] sm:$0xff]
    %v1904 = vld [vmem:[#allocation9 + $0x308] sm:$0xff]
    %v1905 = vld [vmem:[#allocation9 + $0x310] sm:$0xff]
    %v1906 = vld [vmem:[#allocation9 + $0x318] sm:$0xff]
    %v1907 = vld [vmem:[#allocation9 + $0x320] sm:$0xff]
    %v1908 = vld [vmem:[#allocation9 + $0x328] sm:$0xff]
    %v1909 = vld [vmem:[#allocation9 + $0x330] sm:$0xff]
    %v1910 = vld [vmem:[#allocation9 + $0x338] sm:$0xff]
    %v1911 = vld [vmem:[#allocation9 + $0x340] sm:$0xff]
    %v1912 = vld [vmem:[#allocation9 + $0x348] sm:$0xff]
    %v1913 = vld [vmem:[#allocation9 + $0x350] sm:$0xff]
    %v1914 = vld [vmem:[#allocation9 + $0x358] sm:$0xff]
    %v1915 = vld [vmem:[#allocation9 + $0x360] sm:$0xff]
    %v1916 = vld [vmem:[#allocation9 + $0x368] sm:$0xff]
    %v1917 = vld [vmem:[#allocation9 + $0x370] sm:$0xff]
    %v1918 = vld [vmem:[#allocation9 + $0x378] sm:$0xff]
    %v1919 = vld [vmem:[#allocation9 + $0x380] sm:$0xff]
    %v1920 = vld [vmem:[#allocation9 + $0x388] sm:$0xff]
    %v1921 = vld [vmem:[#allocation9 + $0x390] sm:$0xff]
    %v1922 = vld [vmem:[#allocation9 + $0x398] sm:$0xff]
    %v1923 = vld [vmem:[#allocation9 + $0x3a0] sm:$0xff]
    %v1924 = vld [vmem:[#allocation9 + $0x3a8] sm:$0xff]
    %v1925 = vld [vmem:[#allocation9 + $0x3b0] sm:$0xff]
    %v1926 = vld [vmem:[#allocation9 + $0x3b8] sm:$0xff]
    %v1927 = vld [vmem:[#allocation9 + $0x3c0] sm:$0xff]
    %v1928 = vld [vmem:[#allocation9 + $0x3c8] sm:$0xff]
    %v1929 = vld [vmem:[#allocation9 + $0x3d0] sm:$0xff]
    %v1930 = vld [vmem:[#allocation9 + $0x3d8] sm:$0xff]
    %v1931 = vld [vmem:[#allocation9 + $0x3e0] sm:$0xff]
    %v1932 = vld [vmem:[#allocation9 + $0x3e8] sm:$0xff]
    %v1933 = vld [vmem:[#allocation9 + $0x3f0] sm:$0xff]
    %v1934 = vld [vmem:[#allocation9 + $0x3f8] sm:$0xff]
    %v1935 = vld [vmem:[#allocation9 + $0x400] sm:$0xff]
    %v1936 = vld [vmem:[#allocation9 + $0x408] sm:$0xff]
    %v1937 = vld [vmem:[#allocation9 + $0x410] sm:$0xff]
    %v1938 = vld [vmem:[#allocation9 + $0x418] sm:$0xff]
    %v1939 = vld [vmem:[#allocation9 + $0x420] sm:$0xff]
    %v1940 = vld [vmem:[#allocation9 + $0x428] sm:$0xff]
    %v1941 = vld [vmem:[#allocation9 + $0x430] sm:$0xff]
    %v1942 = vld [vmem:[#allocation9 + $0x438] sm:$0xff]
    %v1943 = vld [vmem:[#allocation9 + $0x440] sm:$0xff]
    %v1944 = vld [vmem:[#allocation9 + $0x448] sm:$0xff]
    %v1945 = vld [vmem:[#allocation9 + $0x450] sm:$0xff]
    %v1946 = vld [vmem:[#allocation9 + $0x458] sm:$0xff]
    %v1947 = vld [vmem:[#allocation9 + $0x460] sm:$0xff]
    %v1948 = vld [vmem:[#allocation9 + $0x468] sm:$0xff]
    %v1949 = vld [vmem:[#allocation9 + $0x470] sm:$0xff]
    %v1950 = vld [vmem:[#allocation9 + $0x478] sm:$0xff]
    %v1951 = vld [vmem:[#allocation9 + $0x480] sm:$0xff]
    %v1952 = vld [vmem:[#allocation9 + $0x488] sm:$0xff]
    %v1953 = vld [vmem:[#allocation9 + $0x490] sm:$0xff]
    %v1954 = vld [vmem:[#allocation9 + $0x498] sm:$0xff]
    %v1955 = vld [vmem:[#allocation9 + $0x4a0] sm:$0xff]
    %v1956 = vld [vmem:[#allocation9 + $0x4a8] sm:$0xff]
    %v1957 = vld [vmem:[#allocation9 + $0x4b0] sm:$0xff]
    %v1958 = vld [vmem:[#allocation9 + $0x4b8] sm:$0xff]
    %v1959 = vld [vmem:[#allocation9 + $0x4c0] sm:$0xff]
    %v1960 = vld [vmem:[#allocation9 + $0x4c8] sm:$0xff]
    %v1961 = vld [vmem:[#allocation9 + $0x4d0] sm:$0xff]
    %v1962 = vld [vmem:[#allocation9 + $0x4d8] sm:$0xff]
    %v1963 = vld [vmem:[#allocation9 + $0x4e0] sm:$0xff]
    %v1964 = vld [vmem:[#allocation9 + $0x4e8] sm:$0xff]
    %v1965 = vld [vmem:[#allocation9 + $0x4f0] sm:$0xff]
    %v1966 = vld [vmem:[#allocation9 + $0x4f8] sm:$0xff]
    %v1967 = vld [vmem:[#allocation9 + $0x500] sm:$0xff]
    %v1968 = vld [vmem:[#allocation9 + $0x508] sm:$0xff]
    %v1969 = vld [vmem:[#allocation9 + $0x510] sm:$0xff]
    %v1970 = vld [vmem:[#allocation9 + $0x518] sm:$0xff]
    %v1971 = vld [vmem:[#allocation9 + $0x520] sm:$0xff]
    %v1972 = vld [vmem:[#allocation9 + $0x528] sm:$0xff]
    %v1973 = vld [vmem:[#allocation9 + $0x530] sm:$0xff]
    %v1974 = vld [vmem:[#allocation9 + $0x538] sm:$0xff]
    %v1975 = vld [vmem:[#allocation9 + $0x540] sm:$0xff]
    %v1976 = vld [vmem:[#allocation9 + $0x548] sm:$0xff]
    %v1977 = vld [vmem:[#allocation9 + $0x550] sm:$0xff]
    %v1978 = vld [vmem:[#allocation9 + $0x558] sm:$0xff]
    %v1979 = vld [vmem:[#allocation9 + $0x560] sm:$0xff]
    %v1980 = vld [vmem:[#allocation9 + $0x568] sm:$0xff]
    %v1981 = vld [vmem:[#allocation9 + $0x570] sm:$0xff]
    %v1982 = vld [vmem:[#allocation9 + $0x578] sm:$0xff]
    %v1983 = vld [vmem:[#allocation9 + $0x580] sm:$0xff]
    %v1984 = vld [vmem:[#allocation9 + $0x588] sm:$0xff]
    %v1985 = vld [vmem:[#allocation9 + $0x590] sm:$0xff]
    %v1986 = vld [vmem:[#allocation9 + $0x598] sm:$0xff]
    %v1987 = vld [vmem:[#allocation9 + $0x5a0] sm:$0xff]
    %v1988 = vld [vmem:[#allocation9 + $0x5a8] sm:$0xff]
    %v1989 = vld [vmem:[#allocation9 + $0x5b0] sm:$0xff]
    %v1990 = vld [vmem:[#allocation9 + $0x5b8] sm:$0xff]
    %v1991 = vld [vmem:[#allocation9 + $0x5c0] sm:$0xff]
    %v1992 = vld [vmem:[#allocation9 + $0x5c8] sm:$0xff]
    %v1993 = vld [vmem:[#allocation9 + $0x5d0] sm:$0xff]
    %v1994 = vld [vmem:[#allocation9 + $0x5d8] sm:$0xff]
    %v1995 = vld [vmem:[#allocation9 + $0x5e0] sm:$0xff]
    %v1996 = vld [vmem:[#allocation9 + $0x5e8] sm:$0xff]
    %v1997 = vld [vmem:[#allocation9 + $0x5f0] sm:$0xff]
    %v1998 = vld [vmem:[#allocation9 + $0x5f8] sm:$0xff]
    %v1999 = vld [vmem:[#allocation9 + $0x600] sm:$0xff]
    %v2000 = vld [vmem:[#allocation9 + $0x608] sm:$0xff]
    %v2001 = vld [vmem:[#allocation9 + $0x610] sm:$0xff]
    %v2002 = vld [vmem:[#allocation9 + $0x618] sm:$0xff]
    %v2003 = vld [vmem:[#allocation9 + $0x620] sm:$0xff]
    %v2004 = vld [vmem:[#allocation9 + $0x628] sm:$0xff]
    %v2005 = vld [vmem:[#allocation9 + $0x630] sm:$0xff]
    %v2006 = vld [vmem:[#allocation9 + $0x638] sm:$0xff]
    %v2007 = vld [vmem:[#allocation9 + $0x640] sm:$0xff]
    %v2008 = vld [vmem:[#allocation9 + $0x648] sm:$0xff]
    %v2009 = vld [vmem:[#allocation9 + $0x650] sm:$0xff]
    %v2010 = vld [vmem:[#allocation9 + $0x658] sm:$0xff]
    %v2011 = vld [vmem:[#allocation9 + $0x660] sm:$0xff]
    %v2012 = vld [vmem:[#allocation9 + $0x668] sm:$0xff]
    %v2013 = vld [vmem:[#allocation9 + $0x670] sm:$0xff]
    %v2014 = vld [vmem:[#allocation9 + $0x678] sm:$0xff]
    %v2015 = vld [vmem:[#allocation9 + $0x680] sm:$0xff]
    %v2016 = vld [vmem:[#allocation9 + $0x688] sm:$0xff]
    %v2017 = vld [vmem:[#allocation9 + $0x690] sm:$0xff]
    %v2018 = vld [vmem:[#allocation9 + $0x698] sm:$0xff]
    %v2019 = vld [vmem:[#allocation9 + $0x6a0] sm:$0xff]
    %v2020 = vld [vmem:[#allocation9 + $0x6a8] sm:$0xff]
    %v2021 = vld [vmem:[#allocation9 + $0x6b0] sm:$0xff]
    %v2022 = vld [vmem:[#allocation9 + $0x6b8] sm:$0xff]
    %v2023 = vld [vmem:[#allocation9 + $0x6c0] sm:$0xff]
    %v2024 = vld [vmem:[#allocation9 + $0x6c8] sm:$0xff]
    %v2025 = vld [vmem:[#allocation9 + $0x6d0] sm:$0xff]
    %v2026 = vld [vmem:[#allocation9 + $0x6d8] sm:$0xff]
    %v2027 = vld [vmem:[#allocation9 + $0x6e0] sm:$0xff]
    %v2028 = vld [vmem:[#allocation9 + $0x6e8] sm:$0xff]
    %v2029 = vld [vmem:[#allocation9 + $0x6f0] sm:$0xff]
    %v2030 = vld [vmem:[#allocation9 + $0x6f8] sm:$0xff]
    %v2031 = vld [vmem:[#allocation9 + $0x700] sm:$0xff]
    %v2032 = vld [vmem:[#allocation9 + $0x708] sm:$0xff]
    %v2033 = vld [vmem:[#allocation9 + $0x710] sm:$0xff]
    %v2034 = vld [vmem:[#allocation9 + $0x718] sm:$0xff]
    %v2035 = vld [vmem:[#allocation9 + $0x720] sm:$0xff]
    %v2036 = vld [vmem:[#allocation9 + $0x728] sm:$0xff]
    %v2037 = vld [vmem:[#allocation9 + $0x730] sm:$0xff]
    %v2038 = vld [vmem:[#allocation9 + $0x738] sm:$0xff]
    %v2039 = vld [vmem:[#allocation9 + $0x740] sm:$0xff]
    %v2040 = vld [vmem:[#allocation9 + $0x748] sm:$0xff]
    %v2041 = vld [vmem:[#allocation9 + $0x750] sm:$0xff]
    %v2042 = vld [vmem:[#allocation9 + $0x758] sm:$0xff]
    %v2043 = vld [vmem:[#allocation9 + $0x760] sm:$0xff]
    %v2044 = vld [vmem:[#allocation9 + $0x768] sm:$0xff]
    %v2045 = vld [vmem:[#allocation9 + $0x770] sm:$0xff]
    %v2046 = vld [vmem:[#allocation9 + $0x778] sm:$0xff]
    %v2047 = vld [vmem:[#allocation9 + $0x780] sm:$0xff]
    %v2048 = vld [vmem:[#allocation9 + $0x788] sm:$0xff]
    %v2049 = vld [vmem:[#allocation9 + $0x790] sm:$0xff]
    %v2050 = vld [vmem:[#allocation9 + $0x798] sm:$0xff]
    %v2051 = vld [vmem:[#allocation9 + $0x7a0] sm:$0xff]
    %v2052 = vld [vmem:[#allocation9 + $0x7a8] sm:$0xff]
    %v2053 = vld [vmem:[#allocation9 + $0x7b0] sm:$0xff]
    %v2054 = vld [vmem:[#allocation9 + $0x7b8] sm:$0xff]
    %v2055 = vld [vmem:[#allocation9 + $0x7c0] sm:$0xff]
    %v2056 = vld [vmem:[#allocation9 + $0x7c8] sm:$0xff]
    %v2057 = vld [vmem:[#allocation9 + $0x7d0] sm:$0xff]
    %v2058 = vld [vmem:[#allocation9 + $0x7d8] sm:$0xff]
    %v2059 = vld [vmem:[#allocation9 + $0x7e0] sm:$0xff]
    %v2060 = vld [vmem:[#allocation9 + $0x7e8] sm:$0xff]
    %v2061 = vld [vmem:[#allocation9 + $0x7f0] sm:$0xff]
    %v2062 = vld [vmem:[#allocation9 + $0x7f8] sm:$0xff]
    %v2063 = vld [vmem:[%s8] sm:$0xf]
    %v2065 = vlaneseq
    %v2066 = vshrl.u32 %v2065, 7
    %v2067 = vsub.s32 0, %v2066
    %v2068 = vrot.slane %v2063, %v2067
    %v2069 = vlaneseq
    %v2070 = vshrl.u32 %v2069, 7
    %v2071 = vsub.s32 1, %v2070
    %v2072 = vrot.slane %v2063, %v2071
    %v2073 = vlaneseq
    %v2074 = vshrl.u32 %v2073, 7
    %v2075 = vsub.s32 2, %v2074
    %v2076 = vrot.slane %v2063, %v2075
    %v2077 = vlaneseq
    %v2078 = vshrl.u32 %v2077, 7
    %v2079 = vsub.s32 3, %v2078
    %v2080 = vrot.slane %v2063, %v2079
    %2085 = vmatprep.subr.mxu0 %v1808
    %2086 = vmatpush1.msra.mxu0 %v1807
    %2087 = vmatprep.subr.mxu0 %v1812
    %2088 = vmatpush1.msra.mxu0 %v1811
    %2089 = vmatprep.subr.mxu0 %v1816
    %2090 = vmatpush1.msra.mxu0 %v1815
    %2091 = vmatprep.subr.mxu0 %v1820
    %2092 = vmatpush1.msra.mxu0 %v1819
    %2093 = vmatprep.subr.mxu0 %v1824
    %2094 = vmatpush1.msra.mxu0 %v1823
    %2095 = vmatprep.subr.mxu0 %v1828
    %2096 = vmatpush1.msra.mxu0 %v1827
    %2097 = vmatprep.subr.mxu0 %v1832
    %2098 = vmatpush1.msra.mxu0 %v1831
    %2099 = vmatprep.subr.mxu0 %v1836
    %2100 = vmatpush1.msra.mxu0 %v1835
    %2101 = vmatprep.subr.mxu0 %v1840
    %2102 = vmatpush1.msra.mxu0 %v1839
    %2103 = vmatprep.subr.mxu0 %v1844
    %2104 = vmatpush1.msra.mxu0 %v1843
    %2105 = vmatprep.subr.mxu0 %v1848
    %2106 = vmatpush1.msra.mxu0 %v1847
    %2107 = vmatprep.subr.mxu0 %v1852
    %2108 = vmatpush1.msra.mxu0 %v1851
    %2109 = vmatprep.subr.mxu0 %v1856
    %2110 = vmatpush1.msra.mxu0 %v1855
    %2111 = vmatprep.subr.mxu0 %v1860
    %2112 = vmatpush1.msra.mxu0 %v1859
    %2113 = vmatprep.subr.mxu0 %v1864
    %2114 = vmatpush1.msra.mxu0 %v1863
    %2115 = vmatprep.subr.mxu0 %v1868
    %2116 = vmatpush1.msra.mxu0 %v1867
    %2117 = vmatprep.subr.mxu0 %v1872
    %2118 = vmatpush1.msra.mxu0 %v1871
    %2119 = vmatprep.subr.mxu0 %v1876
    %2120 = vmatpush1.msra.mxu0 %v1875
    %2121 = vmatprep.subr.mxu0 %v1880
    %2122 = vmatpush1.msra.mxu0 %v1879
    %2123 = vmatprep.subr.mxu0 %v1884
    %2124 = vmatpush1.msra.mxu0 %v1883
    %2125 = vmatprep.subr.mxu0 %v1888
    %2126 = vmatpush1.msra.mxu0 %v1887
    %2127 = vmatprep.subr.mxu0 %v1892
    %2128 = vmatpush1.msra.mxu0 %v1891
    %2129 = vmatprep.subr.mxu0 %v1896
    %2130 = vmatpush1.msra.mxu0 %v1895
    %2131 = vmatprep.subr.mxu0 %v1900
    %2132 = vmatpush1.msra.mxu0 %v1899
    %2133 = vmatprep.subr.mxu0 %v1904
    %2134 = vmatpush1.msra.mxu0 %v1903
    %2135 = vmatprep.subr.mxu0 %v1908
    %2136 = vmatpush1.msra.mxu0 %v1907
    %2137 = vmatprep.subr.mxu0 %v1912
    %2138 = vmatpush1.msra.mxu0 %v1911
    %2139 = vmatprep.subr.mxu0 %v1916
    %2140 = vmatpush1.msra.mxu0 %v1915
    %2141 = vmatprep.subr.mxu0 %v1920
    %2142 = vmatpush1.msra.mxu0 %v1919
    %2143 = vmatprep.subr.mxu0 %v1924
    %2144 = vmatpush1.msra.mxu0 %v1923
    %2145 = vmatprep.subr.mxu0 %v1928
    %2146 = vmatpush1.msra.mxu0 %v1927
    %2147 = vmatprep.subr.mxu0 %v1932
    %2148 = vmatpush1.msra.mxu0 %v1931
    %2149 = vmatprep.mubr.f32.mxu0 %v1804
    %2150 = vmatmul.mubr.f32.gmra.mrb[0].mxu0 %v1803
    %v2151 = vpop.f32.mrb[0].mxu0
    %v2152 = vadd.f32 %v2068, %v2151
    %v2153 = vpop.f32.mrb[0].mxu0
    %v2154 = vadd.f32 %v2072, %v2153
    %2155 = vdwg.mxu0
    %2156 = vmatprep.subr.mxu0 %v1936
    %2157 = vmatpush1.msra.mxu0 %v1935
    %2158 = vmatprep.subr.mxu0 %v1940
    %2159 = vmatpush1.msra.mxu0 %v1939
    %2160 = vmatprep.subr.mxu0 %v1944
    %2161 = vmatpush1.msra.mxu0 %v1943
    %2162 = vmatprep.subr.mxu0 %v1948
    %2163 = vmatpush1.msra.mxu0 %v1947
    %2164 = vmatprep.subr.mxu0 %v1952
    %2165 = vmatpush1.msra.mxu0 %v1951
    %2166 = vmatprep.subr.mxu0 %v1956
    %2167 = vmatpush1.msra.mxu0 %v1955
    %2168 = vmatprep.subr.mxu0 %v1960
    %2169 = vmatpush1.msra.mxu0 %v1959
    %2170 = vmatprep.subr.mxu0 %v1964
    %2171 = vmatpush1.msra.mxu0 %v1963
    %2172 = vmatprep.subr.mxu0 %v1968
    %2173 = vmatpush1.msra.mxu0 %v1967
    %2174 = vmatprep.subr.mxu0 %v1972
    %2175 = vmatpush1.msra.mxu0 %v1971
    %2176 = vmatprep.subr.mxu0 %v1976
    %2177 = vmatpush1.msra.mxu0 %v1975
    %2178 = vmatprep.subr.mxu0 %v1980
    %2179 = vmatpush1.msra.mxu0 %v1979
    %2180 = vmatprep.subr.mxu0 %v1984
    %2181 = vmatpush1.msra.mxu0 %v1983
    %2182 = vmatprep.subr.mxu0 %v1988
    %2183 = vmatpush1.msra.mxu0 %v1987
    %2184 = vmatprep.subr.mxu0 %v1992
    %2185 = vmatpush1.msra.mxu0 %v1991
    %2186 = vmatprep.subr.mxu0 %v1996
    %2187 = vmatpush1.msra.mxu0 %v1995
    %2188 = vmatprep.subr.mxu0 %v2000
    %2189 = vmatpush1.msra.mxu0 %v1999
    %2190 = vmatprep.subr.mxu0 %v2004
    %2191 = vmatpush1.msra.mxu0 %v2003
    %2192 = vmatprep.subr.mxu0 %v2008
    %2193 = vmatpush1.msra.mxu0 %v2007
    %2194 = vmatprep.subr.mxu0 %v2012
    %2195 = vmatpush1.msra.mxu0 %v2011
    %2196 = vmatprep.subr.mxu0 %v2016
    %2197 = vmatpush1.msra.mxu0 %v2015
    %2198 = vmatprep.subr.mxu0 %v2020
    %2199 = vmatpush1.msra.mxu0 %v2019
    %2200 = vmatprep.subr.mxu0 %v2024
    %2201 = vmatpush1.msra.mxu0 %v2023
    %2202 = vmatprep.subr.mxu0 %v2028
    %2203 = vmatpush1.msra.mxu0 %v2027
    %2204 = vmatprep.subr.mxu0 %v2032
    %2205 = vmatpush1.msra.mxu0 %v2031
    %2206 = vmatprep.subr.mxu0 %v2036
    %2207 = vmatpush1.msra.mxu0 %v2035
    %2208 = vmatprep.subr.mxu0 %v2040
    %2209 = vmatpush1.msra.mxu0 %v2039
    %2210 = vmatprep.subr.mxu0 %v2044
    %2211 = vmatpush1.msra.mxu0 %v2043
    %2212 = vmatprep.subr.mxu0 %v2048
    %2213 = vmatpush1.msra.mxu0 %v2047
    %2214 = vmatprep.subr.mxu0 %v2052
    %2215 = vmatpush1.msra.mxu0 %v2051
    %2216 = vmatprep.subr.mxu0 %v2056
    %2217 = vmatpush1.msra.mxu0 %v2055
    %2218 = vmatprep.subr.mxu0 %v2060
    %2219 = vmatpush1.msra.mxu0 %v2059
    %2220 = vmatprep.mubr.f32.mxu0 %v1806
    %2221 = vmatmul.mubr.f32.gmra.mrb[0].mxu0 %v1805
    %v2222 = vpop.f32.mrb[0].mxu0
    %v2223 = vadd.f32 %v2152, %v2222
    %v2224 = vpop.f32.mrb[0].mxu0
    %v2225 = vadd.f32 %v2154, %v2224
    %2226 = vdwg.mxu0
    %2227 = vmatprep.subr.mxu0 %v1810
    %2228 = vmatpush1.msra.mxu0 %v1809
    %2229 = vmatprep.subr.mxu0 %v1814
    %2230 = vmatpush1.msra.mxu0 %v1813
    %2231 = vmatprep.subr.mxu0 %v1818
    %2232 = vmatpush1.msra.mxu0 %v1817
    %2233 = vmatprep.subr.mxu0 %v1822
    %2234 = vmatpush1.msra.mxu0 %v1821
    %2235 = vmatprep.subr.mxu0 %v1826
    %2236 = vmatpush1.msra.mxu0 %v1825
    %2237 = vmatprep.subr.mxu0 %v1830
    %2238 = vmatpush1.msra.mxu0 %v1829
    %2239 = vmatprep.subr.mxu0 %v1834
    %2240 = vmatpush1.msra.mxu0 %v1833
    %2241 = vmatprep.subr.mxu0 %v1838
    %2242 = vmatpush1.msra.mxu0 %v1837
    %2243 = vmatprep.subr.mxu0 %v1842
    %2244 = vmatpush1.msra.mxu0 %v1841
    %2245 = vmatprep.subr.mxu0 %v1846
    %2246 = vmatpush1.msra.mxu0 %v1845
    %2247 = vmatprep.subr.mxu0 %v1850
    %2248 = vmatpush1.msra.mxu0 %v1849
    %2249 = vmatprep.subr.mxu0 %v1854
    %2250 = vmatpush1.msra.mxu0 %v1853
    %2251 = vmatprep.subr.mxu0 %v1858
    %2252 = vmatpush1.msra.mxu0 %v1857
    %2253 = vmatprep.subr.mxu0 %v1862
    %2254 = vmatpush1.msra.mxu0 %v1861
    %2255 = vmatprep.subr.mxu0 %v1866
    %2256 = vmatpush1.msra.mxu0 %v1865
    %2257 = vmatprep.subr.mxu0 %v1870
    %2258 = vmatpush1.msra.mxu0 %v1869
    %2259 = vmatprep.subr.mxu0 %v1874
    %2260 = vmatpush1.msra.mxu0 %v1873
    %2261 = vmatprep.subr.mxu0 %v1878
    %2262 = vmatpush1.msra.mxu0 %v1877
    %2263 = vmatprep.subr.mxu0 %v1882
    %2264 = vmatpush1.msra.mxu0 %v1881
    %2265 = vmatprep.subr.mxu0 %v1886
    %2266 = vmatpush1.msra.mxu0 %v1885
    %2267 = vmatprep.subr.mxu0 %v1890
    %2268 = vmatpush1.msra.mxu0 %v1889
    %2269 = vmatprep.subr.mxu0 %v1894
    %2270 = vmatpush1.msra.mxu0 %v1893
    %2271 = vmatprep.subr.mxu0 %v1898
    %2272 = vmatpush1.msra.mxu0 %v1897
    %2273 = vmatprep.subr.mxu0 %v1902
    %2274 = vmatpush1.msra.mxu0 %v1901
    %2275 = vmatprep.subr.mxu0 %v1906
    %2276 = vmatpush1.msra.mxu0 %v1905
    %2277 = vmatprep.subr.mxu0 %v1910
    %2278 = vmatpush1.msra.mxu0 %v1909
    %2279 = vmatprep.subr.mxu0 %v1914
    %2280 = vmatpush1.msra.mxu0 %v1913
    %2281 = vmatprep.subr.mxu0 %v1918
    %2282 = vmatpush1.msra.mxu0 %v1917
    %2283 = vmatprep.subr.mxu0 %v1922
    %2284 = vmatpush1.msra.mxu0 %v1921
    %2285 = vmatprep.subr.mxu0 %v1926
    %2286 = vmatpush1.msra.mxu0 %v1925
    %2287 = vmatprep.subr.mxu0 %v1930
    %2288 = vmatpush1.msra.mxu0 %v1929
    %2289 = vmatprep.subr.mxu0 %v1934
    %2290 = vmatpush1.msra.mxu0 %v1933
    %2291 = vmatprep.mubr.f32.mxu0 %v1804
    %2292 = vmatmul.mubr.f32.gmra.mrb[0].mxu0 %v1803
    %v2293 = vpop.f32.mrb[0].mxu0
    %v2294 = vadd.f32 %v2076, %v2293
    %v2295 = vpop.f32.mrb[0].mxu0
    %v2296 = vadd.f32 %v2080, %v2295
    %2297 = vdwg.mxu0
    %2298 = vmatprep.subr.mxu0 %v1938
    %2299 = vmatpush1.msra.mxu0 %v1937
    %2300 = vmatprep.subr.mxu0 %v1942
    %2301 = vmatpush1.msra.mxu0 %v1941
    %2302 = vmatprep.subr.mxu0 %v1946
    %2303 = vmatpush1.msra.mxu0 %v1945
    %2304 = vmatprep.subr.mxu0 %v1950
    %2305 = vmatpush1.msra.mxu0 %v1949
    %2306 = vmatprep.subr.mxu0 %v1954
    %2307 = vmatpush1.msra.mxu0 %v1953
    %2308 = vmatprep.subr.mxu0 %v1958
    %2309 = vmatpush1.msra.mxu0 %v1957
    %2310 = vmatprep.subr.mxu0 %v1962
    %2311 = vmatpush1.msra.mxu0 %v1961
    %2312 = vmatprep.subr.mxu0 %v1966
    %2313 = vmatpush1.msra.mxu0 %v1965
    %2314 = vmatprep.subr.mxu0 %v1970
    %2315 = vmatpush1.msra.mxu0 %v1969
    %2316 = vmatprep.subr.mxu0 %v1974
    %2317 = vmatpush1.msra.mxu0 %v1973
    %2318 = vmatprep.subr.mxu0 %v1978
    %2319 = vmatpush1.msra.mxu0 %v1977
    %2320 = vmatprep.subr.mxu0 %v1982
    %2321 = vmatpush1.msra.mxu0 %v1981
    %2322 = vmatprep.subr.mxu0 %v1986
    %2323 = vmatpush1.msra.mxu0 %v1985
    %2324 = vmatprep.subr.mxu0 %v1990
    %2325 = vmatpush1.msra.mxu0 %v1989
    %2326 = vmatprep.subr.mxu0 %v1994
    %2327 = vmatpush1.msra.mxu0 %v1993
    %2328 = vmatprep.subr.mxu0 %v1998
    %2329 = vmatpush1.msra.mxu0 %v1997
    %2330 = vmatprep.subr.mxu0 %v2002
    %2331 = vmatpush1.msra.mxu0 %v2001
    %2332 = vmatprep.subr.mxu0 %v2006
    %2333 = vmatpush1.msra.mxu0 %v2005
    %2334 = vmatprep.subr.mxu0 %v2010
    %2335 = vmatpush1.msra.mxu0 %v2009
    %2336 = vmatprep.subr.mxu0 %v2014
    %2337 = vmatpush1.msra.mxu0 %v2013
    %2338 = vmatprep.subr.mxu0 %v2018
    %2339 = vmatpush1.msra.mxu0 %v2017
    %2340 = vmatprep.subr.mxu0 %v2022
    %2341 = vmatpush1.msra.mxu0 %v2021
    %2342 = vmatprep.subr.mxu0 %v2026
    %2343 = vmatpush1.msra.mxu0 %v2025
    %2344 = vmatprep.subr.mxu0 %v2030
    %2345 = vmatpush1.msra.mxu0 %v2029
    %2346 = vmatprep.subr.mxu0 %v2034
    %2347 = vmatpush1.msra.mxu0 %v2033
    %2348 = vmatprep.subr.mxu0 %v2038
    %2349 = vmatpush1.msra.mxu0 %v2037
    %2350 = vmatprep.subr.mxu0 %v2042
    %2351 = vmatpush1.msra.mxu0 %v2041
    %2352 = vmatprep.subr.mxu0 %v2046
    %2353 = vmatpush1.msra.mxu0 %v2045
    %2354 = vmatprep.subr.mxu0 %v2050
    %2355 = vmatpush1.msra.mxu0 %v2049
    %2356 = vmatprep.subr.mxu0 %v2054
    %2357 = vmatpush1.msra.mxu0 %v2053
    %2358 = vmatprep.subr.mxu0 %v2058
    %2359 = vmatpush1.msra.mxu0 %v2057
    %2360 = vmatprep.subr.mxu0 %v2062
    %2361 = vmatpush1.msra.mxu0 %v2061
    %2362 = vmatprep.mubr.f32.mxu0 %v1806
    %2363 = vmatmul.mubr.f32.gmra.mrb[0].mxu0 %v1805
    %v2364 = vpop.f32.mrb[0].mxu0
    %v2365 = vadd.f32 %v2294, %v2364
    %v2366 = vpop.f32.mrb[0].mxu0
    %v2367 = vadd.f32 %v2296, %v2366
    %2368 = vdwg.mxu0
    %v2369 = vadd.f32 %v2223, %v1237
    %v2370 = vadd.f32 %v2225, %v1238
    %v2371 = vadd.f32 %v2365, %v1239
    %v2372 = vadd.f32 %v2367, %v1240
    %v2373 = vmax.f32 %v2369, 0.0
    %v2374 = vmax.f32 %v2370, 0.0
    %v2375 = vmax.f32 %v2371, 0.0
    %v2376 = vmax.f32 %v2372, 0.0
    %v2377 = vld [vmem:[%s9] sm:$0xf]
    %v2379 = vlaneseq
    %v2380 = vshrl.u32 %v2379, 7
    %v2381 = vsub.s32 0, %v2380
    %v2382 = vrot.slane %v2377, %v2381
    %v2383 = vlaneseq
    %v2384 = vshrl.u32 %v2383, 7
    %v2385 = vsub.s32 1, %v2384
    %v2386 = vrot.slane %v2377, %v2385
    %v2387 = vlaneseq
    %v2388 = vshrl.u32 %v2387, 7
    %v2389 = vsub.s32 2, %v2388
    %v2390 = vrot.slane %v2377, %v2389
    %v2391 = vlaneseq
    %v2392 = vshrl.u32 %v2391, 7
    %v2393 = vsub.s32 3, %v2392
    %v2394 = vrot.slane %v2377, %v2393
    %v2399 = vmul.f32 %v2373, %v2382
    %v2400 = vmul.f32 %v2374, %v2386
    %v2401 = vmul.f32 %v2375, %v2390
    %v2402 = vmul.f32 %v2376, %v2394
    %v2403 = vadd.f32 %v2399, %v2400
    %v2404 = vadd.f32 %v2403, %v2401
    %v2405 = vadd.f32 %v2404, %v2402
    %2406 = vadd.xlane.f32.xlu0 %v2405
    %v2407 = vpop.xlane.xlu0 %2406
    %vm2408 = vcmask 7168
    %2409 = vst.msk [vmem:[%s10] sm:$0xff] %vm2408, %v2407
    // Predicated region
    $region62: #{tpu_custom_call.1} parent=1 // pred_check
      _
    $region63: #{tpu_custom_call.1} parent=1 // pred_check_branch
      %2411 = sbr.rel (0) target = $region65
    $region64: #{tpu_custom_call.1} parent=1 // pred_region
      _
    $region65: #{tpu_custom_call.1} parent=1 // pred_fallthru
      _
    // Predicated region
    $region66: #{tpu_custom_call.1} parent=1 // pred_check
      _
    $region67: #{tpu_custom_call.1} parent=1 // pred_check_branch
      %2413 = sbr.rel (0) target = $region69
    $region68: #{tpu_custom_call.1} parent=1 // pred_region
      _
    $region69: #{tpu_custom_call.1} parent=1 // pred_fallthru
      _
    %2414 = vsyncpa [#allocation3], 1
    %2415 = vsyncpa [#allocation5], 1
    %2416 = vsyncpa [#allocation8], 1

</llo_original>
